<compile_context>
chip_gen: v7x
topology: tpu7x:2x2x1
jax: 0.10.0
libtpu: 0.0.40
codegen_flags: <defaults>
</compile_context>

<pallas_src>
import functools

import jax
import jax.numpy as jnp
from jax import lax
from jax.experimental import pallas as pl
from jax.experimental.pallas import tpu as pltpu

EPS = 1e-5


def _round_up(a, b):
    return (a + b - 1) // b * b


# ---------------------------------------------------------------------------
# Fused kernel: conv7x7/s2 (4 grouped K=128 matmuls) + BN shift + ReLU + maxpool
# ---------------------------------------------------------------------------
def _stem_kernel(x_ref, w_ref, b_ref, o_ref, wide_ref, cpool_ref,
                 *, Ho, Wo, Ws, Po, Qo):
    """One batch image per grid step.

    x_ref     : (1, Mp, Cs)         space-to-depth rows (Cs = 4*Cin_pad = 32)
    w_ref     : (4, 4*Cs, Cout)     per-row-phase weights, BN scale folded in
    b_ref     : (1, Cout)           BN shift
    o_ref     : (1, Po, Qo, Cout)   pooled output
    wide_ref  : (3*Ws + Ho*Ws, 4*Cs)  shift-stacked LHS slab (VMEM scratch)
    cpool_ref : (Po, Ws + 8, Cout)    column-pool staging slab (VMEM scratch)
    """
    cout = o_ref.shape[-1]
    cs = x_ref.shape[-1]
    L = Ho * Ws                      # conv accumulator rows (cols >= Wo are junk)
    M = wide_ref.shape[0]            # 3*Ws + L

    # ---- assemble shift-stacked LHS slab: wide[m, r*Cs:(r+1)*Cs] = x[m + r] --------
    for r in range(4):
        wide_ref[:, r * cs:(r + 1) * cs] = x_ref[0, r:r + M, :]

    # ---- conv as 4 matmuls of K = 4*Cs = 128, f32 accumulation on the MXU ----------
    acc = None
    for q in range(4):
        base = q * Ws                                    # Ws % 8 == 0 -> aligned slice
        part = jnp.dot(wide_ref[base:base + L, :], w_ref[q],
                       preferred_element_type=jnp.float32)
        acc = part if acc is None else acc + part

    # ---- fused eval-mode BN shift + ReLU (scale already folded into the weights) ---
    act = jnp.maximum(acc + b_ref[...].astype(jnp.float32), 0.0)     # (L, Cout) >= 0
    act3 = act.reshape(Ho, Ws, cout)                     # pure re-indexing (Ws % 8 == 0)

    # zero the junk columns (w >= Wo) so they never win a pooling max
    wcol = lax.broadcasted_iota(jnp.int32, (Ho, Ws, cout), 1)
    act3 = jnp.where(wcol < Wo, act3, 0.0)

    # ---- 3x3 / stride-2 / pad-1 max pool.  act >= 0, so zero padding == -inf pad. --
    # rows: three shifted row-block slices (major-dim ops only, no relayout)
    pad_bot = 2 * Po + 1 - Ho                            # 1 or 2 (static)
    A = jnp.concatenate(
        [jnp.zeros((1, Ws, cout), jnp.float32), act3,
         jnp.zeros((pad_bot, Ws, cout), jnp.float32)], axis=0)        # (2*Po+2, Ws, C)
    Ar = A.reshape(Po + 1, 2, Ws, cout)
    rpool = jnp.maximum(jnp.maximum(Ar[:Po, 0], Ar[:Po, 1]), Ar[1:, 0])  # (Po, Ws, C)

    # columns: stage in VMEM, then three sublane-strided taps (stride 2)
    cpool_ref[:, 7:8, :] = jnp.zeros((Po, 1, cout), jnp.float32)      # left border (-inf)
    cpool_ref[:, 8:8 + Ws, :] = rpool
    pooled = jnp.maximum(
        jnp.maximum(cpool_ref[:, pl.ds(7, Qo, 2), :],                 # col 2q-1
                    cpool_ref[:, pl.ds(8, Qo, 2), :]),                # col 2q
        cpool_ref[:, pl.ds(9, Qo, 2), :])                             # col 2q+1
    o_ref[0] = pooled.astype(o_ref.dtype)


# ---------------------------------------------------------------------------
# Wrapper: cheap O(input) repack + BN/weight folding, then one pallas_call
# ---------------------------------------------------------------------------
def net_exit1_part1l_forward(x_nchw, params, *, compute_dtype=jnp.float32):
    """conv1(7x7,s2,p3,no bias) -> bn1(eval) -> relu -> maxpool(3x3,s2,p1). NCHW in/out.

    compute_dtype=jnp.bfloat16 halves LHS/weight VMEM & DMA on v6e/v7x (accumulation
    stays f32); default f32 keeps bit-tight accuracy.
    """
    w = params["conv1"]                                    # (Cout, Cin, 7, 7)
    bn = params["bn1"]
    n, cin, h, wdt = x_nchw.shape
    cout = w.shape[0]

    ho = (h + 2 * 3 - 7) // 2 + 1
    wo = (wdt + 2 * 3 - 7) // 2 + 1
    po = (ho - 1) // 2 + 1
    qo = (wo - 1) // 2 + 1
    hs = ho + 3                                            # s2d row extent
    ws = _round_up(wo + 3, 8)                              # s2d col extent, sublane aligned
    cin_p = 8                                              # pad Cin 3 -> 8  => Cs = 32
    cs = 4 * cin_p

    # --- stride-2 space-to-depth repack (no im2col blow-up in HBM) --------------------
    xh = jnp.transpose(x_nchw, (0, 2, 3, 1))               # NCHW -> NHWC
    xh = jnp.pad(xh, ((0, 0), (0, 0), (0, 0), (0, cin_p - cin)))
    xp = jnp.pad(xh, ((0, 0), (3, 2 * hs - h - 3), (3, 2 * ws - wdt - 3), (0, 0)))
    x_s2d = (xp.reshape(n, hs, 2, ws, 2, cin_p)
               .transpose(0, 1, 3, 2, 4, 5)                # (n, I, J, a, b, c)
               .reshape(n, hs, ws, cs))
    mp = _round_up(hs * ws + 3, 8)                         # + slack so tap slices stay in-bounds
    x_flat = jnp.pad(x_s2d.reshape(n, hs * ws, cs),
                     ((0, 0), (0, mp - hs * ws), (0, 0))).astype(compute_dtype)

    # --- fold eval-mode BN scale into the conv weights; group taps per row-phase q ----
    scale = bn["gamma"] * lax.rsqrt(bn["var"] + EPS)
    shift = (bn["beta"] - bn["mean"] * scale).reshape(1, cout).astype(jnp.float32)
    w_hw = jnp.transpose(w, (2, 3, 1, 0)) * scale.reshape(1, 1, 1, cout)   # (7,7,Cin,Cout)
    w_hw = jnp.pad(w_hw, ((0, 1), (0, 1), (0, cin_p - cin), (0, 0)))       # (8,8,8,Cout)
    w_g = (w_hw.reshape(4, 2, 4, 2, cin_p, cout)
               .transpose(0, 2, 1, 3, 4, 5)                # (qh, qw, a, b, c, o)
               .reshape(4, 4 * cs, cout)).astype(compute_dtype)            # (4, 128, Cout)

    m_wide = hs * ws                                       # = 3*ws + ho*ws
    kernel = functools.partial(_stem_kernel, Ho=ho, Wo=wo, Ws=ws, Po=po, Qo=qo)

    # --- explicit VMEM budget (lane-padded, with headroom) ----------------------------
    lane, f32b = 128, 4
    est = (2 * mp * lane * f32b                            # double-buffered input block
           + 2 * 4 * 4 * cs * lane * f32b                  # weights
           + m_wide * lane * f32b                          # shift-stacked LHS scratch
           + po * _round_up(ws + 8, 8) * lane * f32b       # column-pool staging scratch
           + 8 * ho * ws * lane * f32b                     # acc/act/pool values headroom
           + 2 * po * qo * lane * f32b)                    # double-buffered output block
    vmem_limit = int(min(64 * 2 ** 20, max(16 * 2 ** 20, 2 * est)))

    out = pl.pallas_call(
        kernel,
        out_shape=jax.ShapeDtypeStruct((n, po, qo, cout), jnp.float32),
        grid_spec=pltpu.PrefetchScalarGridSpec(
            num_scalar_prefetch=0,
            grid=(n,),
            in_specs=[
                pl.BlockSpec((1, mp, cs), lambda i: (i, 0, 0)),
                pl.BlockSpec((4, 4 * cs, cout), lambda i: (0, 0, 0)),
                pl.BlockSpec((1, cout), lambda i: (0, 0)),
            ],
            out_specs=pl.BlockSpec((1, po, qo, cout), lambda i: (i, 0, 0, 0)),
            scratch_shapes=[
                pltpu.VMEM((m_wide, 4 * cs), compute_dtype),     # shift-stacked LHS slab
                pltpu.VMEM((po, ws + 8, cout), jnp.float32),     # column-pool staging
            ],
        ),
        compiler_params=pltpu.CompilerParams(
            dimension_semantics=("parallel",),
            vmem_limit_bytes=vmem_limit,
        ),
    )(x_flat, w_g, shift)

    return jnp.transpose(out, (0, 3, 1, 2))                # NHWC-ish -> NCHW


# ---------------------------------------------------------------------------
# Deterministic parameter init (shapes per the PyTorch module)
# ---------------------------------------------------------------------------
def init_params(key):
    k1, k2, k3, k4, k5 = jax.random.split(key, 5)
    conv1 = 0.05 * jax.random.normal(k1, (64, 3, 7, 7), jnp.float32)
    gamma = 1.0 + 0.1 * jax.random.normal(k2, (64,), jnp.float32)
    beta = 0.1 * jax.random.normal(k3, (64,), jnp.float32)
    mean = 0.1 * jax.random.normal(k4, (64,), jnp.float32)
    var = jax.nn.softplus(jax.random.normal(k5, (64,), jnp.float32)) + 0.5
    return {"conv1": conv1,
            "bn1": dict(gamma=gamma, beta=beta, mean=mean, var=var)}


# ---------------------------------------------------------------------------
# Pure-JAX reference (correctness check)
# ---------------------------------------------------------------------------
def ref_forward(x, p):
    y = lax.conv_general_dilated(x, p["conv1"], (2, 2), [(3, 3), (3, 3)],
                                 dimension_numbers=("NCHW", "OIHW", "NCHW"))
    scale = p["bn1"]["gamma"] / jnp.sqrt(p["bn1"]["var"] + EPS)
    shift = p["bn1"]["beta"] - p["bn1"]["mean"] * scale
    y = jnp.maximum(y * scale[None, :, None, None] + shift[None, :, None, None], 0.0)
    y = lax.reduce_window(y, -jnp.inf, lax.max, (1, 1, 3, 3), (1, 1, 2, 2),
                          [(0, 0), (0, 0), (1, 1), (1, 1)])
    return y


# ---------------------------------------------------------------------------
if __name__ == "__main__":
    key = jax.random.PRNGKey(0)
    kx, kp = jax.random.split(key)
    x = jax.random.normal(kx, (2, 3, 16, 16), jnp.float32)   # NCHW, like the PyTorch module
    params = init_params(kp)

    out = jax.block_until_ready(jax.jit(net_exit1_part1l_forward)(x, params))
    ref = jax.block_until_ready(ref_forward(x, params))

    assert out.shape == (2, 64, 4, 4), out.shape
    err = float(jnp.max(jnp.abs(out - ref)))
    assert jnp.allclose(out, ref, rtol=2e-4, atol=2e-4), err

    print("KERNEL_OK")
</pallas_src>

<mosaic_0001>
module attributes {stable_mosaic.version = 11 : i64} {
  func.func @_stem_kernel(%arg0: i32, %arg1: memref<1x184x32xf32, #tpu.memory_space<vmem>>, %arg2: memref<4x128x64xf32, #tpu.memory_space<vmem>>, %arg3: memref<1x64xf32, #tpu.memory_space<vmem>>, %arg4: memref<1x4x4x64xf32, #tpu.memory_space<vmem>>, %arg5: memref<176x128xf32, #tpu.memory_space<vmem>>, %arg6: memref<4x24x64xf32, #tpu.memory_space<vmem>>) attributes {dimension_semantics = [#tpu.dimension_semantics<parallel>], iteration_bounds = array<i64: 2>, scalar_prefetch = 0 : i64, scratch_operands = 2 : i64, tpu.core_type = #tpu.core_type<tc>, window_params = [{transform_indices = @transform_0, window_bounds = array<i64: 1, 184, 32>}, {pipeline_mode = #tpu.pipeline_mode<synchronous>, transform_indices = @transform_1, window_bounds = array<i64: 4, 128, 64>}, {pipeline_mode = #tpu.pipeline_mode<synchronous>, transform_indices = @transform_2, window_bounds = array<i64: 1, 64>}, {transform_indices = @transform_3, window_bounds = array<i64: 1, 4, 4, 64>}]} {
    %c0 = arith.constant 0 : index
    %c0_0 = arith.constant 0 : index
    %c0_1 = arith.constant 0 : index
    %0 = vector.load %arg1[%c0, %c0_0, %c0_1] : memref<1x184x32xf32, #tpu.memory_space<vmem>>, vector<1x176x32xf32>
    %1 = vector.shape_cast %0 : vector<1x176x32xf32> to vector<176x32xf32>
    %c0_2 = arith.constant 0 : index
    %c0_3 = arith.constant 0 : index
    %2 = vector.load %arg5[%c0_2, %c0_3] : memref<176x128xf32, #tpu.memory_space<vmem>>, vector<176x32xf32>
    tpu.vector_store %arg5[%c0_2, %c0_3], %1 {strides = array<i32>} : memref<176x128xf32, #tpu.memory_space<vmem>>, vector<176x32xf32>,
    %c0_4 = arith.constant 0 : index
    %c1 = arith.constant 1 : index
    %c0_5 = arith.constant 0 : index
    %3 = vector.load %arg1[%c0_4, %c1, %c0_5] : memref<1x184x32xf32, #tpu.memory_space<vmem>>, vector<1x176x32xf32>
    %4 = vector.shape_cast %3 : vector<1x176x32xf32> to vector<176x32xf32>
    %c0_6 = arith.constant 0 : index
    %c32 = arith.constant 32 : index
    %5 = vector.load %arg5[%c0_6, %c32] : memref<176x128xf32, #tpu.memory_space<vmem>>, vector<176x32xf32>
    tpu.vector_store %arg5[%c0_6, %c32], %4 {strides = array<i32>} : memref<176x128xf32, #tpu.memory_space<vmem>>, vector<176x32xf32>,
    %c0_7 = arith.constant 0 : index
    %c2 = arith.constant 2 : index
    %c0_8 = arith.constant 0 : index
    %6 = vector.load %arg1[%c0_7, %c2, %c0_8] : memref<1x184x32xf32, #tpu.memory_space<vmem>>, vector<1x176x32xf32>
    %7 = vector.shape_cast %6 : vector<1x176x32xf32> to vector<176x32xf32>
    %c0_9 = arith.constant 0 : index
    %c64 = arith.constant 64 : index
    %8 = vector.load %arg5[%c0_9, %c64] : memref<176x128xf32, #tpu.memory_space<vmem>>, vector<176x32xf32>
    tpu.vector_store %arg5[%c0_9, %c64], %7 {strides = array<i32>} : memref<176x128xf32, #tpu.memory_space<vmem>>, vector<176x32xf32>,
    %c0_10 = arith.constant 0 : index
    %c3 = arith.constant 3 : index
    %c0_11 = arith.constant 0 : index
    %9 = vector.load %arg1[%c0_10, %c3, %c0_11] : memref<1x184x32xf32, #tpu.memory_space<vmem>>, vector<1x176x32xf32>
    %10 = vector.shape_cast %9 : vector<1x176x32xf32> to vector<176x32xf32>
    %c0_12 = arith.constant 0 : index
    %c96 = arith.constant 96 : index
    %11 = vector.load %arg5[%c0_12, %c96] : memref<176x128xf32, #tpu.memory_space<vmem>>, vector<176x32xf32>
    tpu.vector_store %arg5[%c0_12, %c96], %10 {strides = array<i32>} : memref<176x128xf32, #tpu.memory_space<vmem>>, vector<176x32xf32>,
    %c0_13 = arith.constant 0 : index
    %c0_14 = arith.constant 0 : index
    %12 = vector.load %arg5[%c0_13, %c0_14] : memref<176x128xf32, #tpu.memory_space<vmem>>, vector<128x128xf32>
    %c0_15 = arith.constant 0 : index
    %c0_16 = arith.constant 0 : index
    %c0_17 = arith.constant 0 : index
    %13 = vector.load %arg2[%c0_15, %c0_16, %c0_17] : memref<4x128x64xf32, #tpu.memory_space<vmem>>, vector<1x128x64xf32>
    %14 = vector.shape_cast %13 : vector<1x128x64xf32> to vector<128x64xf32>
    %cst = arith.constant dense<0.000000e+00> : vector<128x64xf32>
    %15 = tpu.matmul %12, %14, %cst {dimension_numbers = #tpu.dot_dimension_numbers<[1], [0], [0], [1], [0, 0, 1, 1], [], []>} : vector<128x128xf32>, vector<128x64xf32>, vector<128x64xf32> -> vector<128x64xf32>
    %c16 = arith.constant 16 : index
    %c0_18 = arith.constant 0 : index
    %16 = vector.load %arg5[%c16, %c0_18] : memref<176x128xf32, #tpu.memory_space<vmem>>, vector<128x128xf32>
    %c1_19 = arith.constant 1 : index
    %c0_20 = arith.constant 0 : index
    %c0_21 = arith.constant 0 : index
    %17 = vector.load %arg2[%c1_19, %c0_20, %c0_21] : memref<4x128x64xf32, #tpu.memory_space<vmem>>, vector<1x128x64xf32>
    %18 = vector.shape_cast %17 : vector<1x128x64xf32> to vector<128x64xf32>
    %cst_22 = arith.constant dense<0.000000e+00> : vector<128x64xf32>
    %19 = tpu.matmul %16, %18, %cst_22 {dimension_numbers = #tpu.dot_dimension_numbers<[1], [0], [0], [1], [0, 0, 1, 1], [], []>} : vector<128x128xf32>, vector<128x64xf32>, vector<128x64xf32> -> vector<128x64xf32>
    %20 = arith.addf %15, %19 : vector<128x64xf32>
    %c32_23 = arith.constant 32 : index
    %c0_24 = arith.constant 0 : index
    %21 = vector.load %arg5[%c32_23, %c0_24] : memref<176x128xf32, #tpu.memory_space<vmem>>, vector<128x128xf32>
    %c2_25 = arith.constant 2 : index
    %c0_26 = arith.constant 0 : index
    %c0_27 = arith.constant 0 : index
    %22 = vector.load %arg2[%c2_25, %c0_26, %c0_27] : memref<4x128x64xf32, #tpu.memory_space<vmem>>, vector<1x128x64xf32>
    %23 = vector.shape_cast %22 : vector<1x128x64xf32> to vector<128x64xf32>
    %cst_28 = arith.constant dense<0.000000e+00> : vector<128x64xf32>
    %24 = tpu.matmul %21, %23, %cst_28 {dimension_numbers = #tpu.dot_dimension_numbers<[1], [0], [0], [1], [0, 0, 1, 1], [], []>} : vector<128x128xf32>, vector<128x64xf32>, vector<128x64xf32> -> vector<128x64xf32>
    %25 = arith.addf %20, %24 : vector<128x64xf32>
    %c48 = arith.constant 48 : index
    %c0_29 = arith.constant 0 : index
    %26 = vector.load %arg5[%c48, %c0_29] : memref<176x128xf32, #tpu.memory_space<vmem>>, vector<128x128xf32>
    %c3_30 = arith.constant 3 : index
    %c0_31 = arith.constant 0 : index
    %c0_32 = arith.constant 0 : index
    %27 = vector.load %arg2[%c3_30, %c0_31, %c0_32] : memref<4x128x64xf32, #tpu.memory_space<vmem>>, vector<1x128x64xf32>
    %28 = vector.shape_cast %27 : vector<1x128x64xf32> to vector<128x64xf32>
    %cst_33 = arith.constant dense<0.000000e+00> : vector<128x64xf32>
    %29 = tpu.matmul %26, %28, %cst_33 {dimension_numbers = #tpu.dot_dimension_numbers<[1], [0], [0], [1], [0, 0, 1, 1], [], []>} : vector<128x128xf32>, vector<128x64xf32>, vector<128x64xf32> -> vector<128x64xf32>
    %30 = arith.addf %25, %29 : vector<128x64xf32>
    %c0_34 = arith.constant 0 : index
    %c0_35 = arith.constant 0 : index
    %31 = vector.load %arg3[%c0_34, %c0_35] : memref<1x64xf32, #tpu.memory_space<vmem>>, vector<1x64xf32>
    %32 = vector.broadcast %31 : vector<1x64xf32> to vector<128x64xf32>
    %33 = arith.addf %30, %32 : vector<128x64xf32>
    %cst_36 = arith.constant 0.000000e+00 : f32
    %34 = vector.broadcast %cst_36 : f32 to vector<128x64xf32>
    %35 = arith.maximumf %33, %34 : vector<128x64xf32>
    %36 = vector.shape_cast %35 : vector<128x64xf32> to vector<8x16x64xf32>
    %37 = tpu.iota {dimensions = array<i32: 1>} : vector<8x16x64xi32>
    %c8_i32 = arith.constant 8 : i32
    %38 = vector.broadcast %c8_i32 : i32 to vector<8x16x64xi32>
    %39 = arith.cmpi slt, %37, %38 : vector<8x16x64xi32>
    %cst_37 = arith.constant 0.000000e+00 : f32
    %40 = vector.broadcast %cst_37 : f32 to vector<8x16x64xf32>
    %41 = arith.select %39, %36, %40 : vector<8x16x64xi1>, vector<8x16x64xf32>
    %cst_38 = arith.constant 0.000000e+00 : f32
    %42 = vector.broadcast %cst_38 : f32 to vector<1x16x64xf32>
    %cst_39 = arith.constant 0.000000e+00 : f32
    %43 = vector.broadcast %cst_39 : f32 to vector<1x16x64xf32>
    %44 = tpu.concatenate %42, %41, %43 in 0 : vector<1x16x64xf32>, vector<8x16x64xf32>, vector<1x16x64xf32> -> vector<10x16x64xf32>
    %45 = vector.shape_cast %44 : vector<10x16x64xf32> to vector<5x2x16x64xf32>
    %46 = vector.extract_strided_slice %45 {offsets = [0, 0, 0, 0], sizes = [4, 1, 16, 64], strides = [1, 1, 1, 1]} : vector<5x2x16x64xf32> to vector<4x1x16x64xf32>
    %47 = vector.shape_cast %46 : vector<4x1x16x64xf32> to vector<4x16x64xf32>
    %48 = vector.extract_strided_slice %45 {offsets = [0, 1, 0, 0], sizes = [4, 1, 16, 64], strides = [1, 1, 1, 1]} : vector<5x2x16x64xf32> to vector<4x1x16x64xf32>
    %49 = vector.shape_cast %48 : vector<4x1x16x64xf32> to vector<4x16x64xf32>
    %50 = arith.maximumf %47, %49 : vector<4x16x64xf32>
    %51 = vector.extract_strided_slice %45 {offsets = [1, 0, 0, 0], sizes = [4, 1, 16, 64], strides = [1, 1, 1, 1]} : vector<5x2x16x64xf32> to vector<4x1x16x64xf32>
    %52 = vector.shape_cast %51 : vector<4x1x16x64xf32> to vector<4x16x64xf32>
    %53 = arith.maximumf %50, %52 : vector<4x16x64xf32>
    %cst_40 = arith.constant 0.000000e+00 : f32
    %54 = vector.broadcast %cst_40 : f32 to vector<4x1x64xf32>
    %c0_41 = arith.constant 0 : index
    %c7 = arith.constant 7 : index
    %c0_42 = arith.constant 0 : index
    %55 = vector.load %arg6[%c0_41, %c7, %c0_42] : memref<4x24x64xf32, #tpu.memory_space<vmem>>, vector<4x1x64xf32>
    tpu.vector_store %arg6[%c0_41, %c7, %c0_42], %54 {strides = array<i32>} : memref<4x24x64xf32, #tpu.memory_space<vmem>>, vector<4x1x64xf32>,
    %c0_43 = arith.constant 0 : index
    %c8 = arith.constant 8 : index
    %c0_44 = arith.constant 0 : index
    %56 = vector.load %arg6[%c0_43, %c8, %c0_44] : memref<4x24x64xf32, #tpu.memory_space<vmem>>, vector<4x16x64xf32>
    tpu.vector_store %arg6[%c0_43, %c8, %c0_44], %53 {strides = array<i32>} : memref<4x24x64xf32, #tpu.memory_space<vmem>>, vector<4x16x64xf32>,
    %c0_45 = arith.constant 0 : index
    %c7_46 = arith.constant 7 : index
    %c0_47 = arith.constant 0 : index
    %57 = tpu.strided_load %arg6[%c0_45, %c7_46, %c0_47] {strides = array<i32: 1, 2, 1>} : memref<4x24x64xf32, #tpu.memory_space<vmem>>, vector<4x4x64xf32>
    %c0_48 = arith.constant 0 : index
    %c8_49 = arith.constant 8 : index
    %c0_50 = arith.constant 0 : index
    %58 = tpu.strided_load %arg6[%c0_48, %c8_49, %c0_50] {strides = array<i32: 1, 2, 1>} : memref<4x24x64xf32, #tpu.memory_space<vmem>>, vector<4x4x64xf32>
    %59 = arith.maximumf %57, %58 : vector<4x4x64xf32>
    %c0_51 = arith.constant 0 : index
    %c9 = arith.constant 9 : index
    %c0_52 = arith.constant 0 : index
    %60 = tpu.strided_load %arg6[%c0_51, %c9, %c0_52] {strides = array<i32: 1, 2, 1>} : memref<4x24x64xf32, #tpu.memory_space<vmem>>, vector<4x4x64xf32>
    %61 = arith.maximumf %59, %60 : vector<4x4x64xf32>
    %c0_53 = arith.constant 0 : index
    %c0_54 = arith.constant 0 : index
    %c0_55 = arith.constant 0 : index
    %c0_56 = arith.constant 0 : index
    %62 = vector.load %arg4[%c0_53, %c0_54, %c0_55, %c0_56] : memref<1x4x4x64xf32, #tpu.memory_space<vmem>>, vector<1x4x4x64xf32>
    %63 = vector.shape_cast %62 : vector<1x4x4x64xf32> to vector<4x4x64xf32>
    %64 = vector.shape_cast %61 : vector<4x4x64xf32> to vector<1x4x4x64xf32>
    tpu.vector_store %arg4[%c0_53, %c0_54, %c0_55, %c0_56], %64 {strides = array<i32>} : memref<1x4x4x64xf32, #tpu.memory_space<vmem>>, vector<1x4x4x64xf32>,
    return
  }
  func.func @transform_0(%arg0: i32) -> (i32, i32, i32) {
    %c0_i32 = arith.constant 0 : i32
    %c0_i32_0 = arith.constant 0 : i32
    %c0_i32_1 = arith.constant 0 : i32
    return %arg0, %c0_i32, %c0_i32_0 : i32, i32, i32
  }
  func.func @transform_1(%arg0: i32) -> (i32, i32, i32) {
    %c0_i32 = arith.constant 0 : i32
    %c0_i32_0 = arith.constant 0 : i32
    %c0_i32_1 = arith.constant 0 : i32
    %c0_i32_2 = arith.constant 0 : i32
    return %c0_i32, %c0_i32_0, %c0_i32_1 : i32, i32, i32
  }
  func.func @transform_2(%arg0: i32) -> (i32, i32) {
    %c0_i32 = arith.constant 0 : i32
    %c0_i32_0 = arith.constant 0 : i32
    %c0_i32_1 = arith.constant 0 : i32
    return %c0_i32, %c0_i32_0 : i32, i32
  }
  func.func @transform_3(%arg0: i32) -> (i32, i32, i32, i32) {
    %c0_i32 = arith.constant 0 : i32
    %c0_i32_0 = arith.constant 0 : i32
    %c0_i32_1 = arith.constant 0 : i32
    %c0_i32_2 = arith.constant 0 : i32
    return %arg0, %c0_i32, %c0_i32_0, %c0_i32_1 : i32, i32, i32, i32
  }
}

</mosaic_0001>

<llo_original>
// kernel: net_exit1_part1l_forward.1
$region0: #{net_exit1_part1l_forward.1}
  #allocation0 [shape = 'u32[]', space=smem, size = 0x4, offset = 0x4, fixed_abs, tag = 'smem constant byte address 0x4 - core index']
  #allocation1 [shape = 'u32[144,128]{1,0:T(1,128)}', space=vmem, size = 0x12000, scoped, tag = 'internal scratch']
  #allocation2 [shape = 'f32[176,128]{1,0:T(8,128)}', space=vmem, size = 0x16000, scoped, tag = 'scratch operand']
  #allocation3 [shape = 'f32[4,24,64]{2,1,0:T(8,128)}', space=vmem, size = 0xc000, scoped, tag = 'scratch operand']
  %s0 = inlined_call_operand.vmem [shape: f32[2,184,32], index: 0, kind: input, shape index: {}]
  %s1 = inlined_call_operand.vmem [shape: f32[4,128,64], index: 1, kind: input, shape index: {}]
  %s2 = inlined_call_operand.vmem [shape: f32[1,64], index: 2, kind: input, shape index: {}]
  %s3 = inlined_call_operand.hbm [shape: f32[2,4,4,64], index: 3, kind: output, shape index: {}]
  %s4 = sld [smem:[#allocation0]]
  $region45: #{net_exit1_part1l_forward.1} parent=0
    _
  %s6 = ssub.s32 1, %s4
  %s7 = scalar_select 0, %s6, %s4
  $region1: #{net_exit1_part1l_forward.1} parent=0
    #allocation4 [shape = 'u8[16384]{0}', space=vmem, size = 0x4000, scoped, tag = 'output window, operand 0']
    #allocation5 [shape = 's32[2]{0}', space=sflag, size = 0x8, scoped, tag = 'scoped memory for net_exit1_part1l_forward.1']
    %8 = vsyncpa [#allocation5], 0
    %s9 = scalar_lea.sflag [#allocation5], 1
    %10 = vsyncpa %s9, 0
    loop: start=0, step=1, limit=4
    $region2: #{net_exit1_part1l_forward.1} parent=1 // loop_pre_header
      _
    $region3: #{net_exit1_part1l_forward.1} parent=1 // loop_header
      %s12 = sphi 0, %s16
      %p13 = scmp.ge.s32.totalorder %s12, 4
      %s22 = sphi 0, %s24
      %s25 = sphi 0, %s22
      %s26 = sphi 0, %s25
      %s42 = sphi 0, %s26
      %s46 = sphi 0, %s46
      %s48 = sphi 0, %s46
      %s49 = sphi 0, %s48
      %s63 = sphi 0, %s49
      %s67 = sphi 0, %s67
      %s69 = sphi 0, %s67
      %s70 = sphi 0, %s69
      %s84 = sphi 0, %s70
      %s90 = sphi 0, %s92
      %s93 = sphi 0, %s90
      %s94 = sphi 0, %s93
      %s110 = sphi 0, %s94
    $region4: #{net_exit1_part1l_forward.1} parent=1 // loop_header_branch
      %15 = sbr.rel (%p13) target = $region8
    $region5: #{net_exit1_part1l_forward.1} parent=1 // loop_body
      %s17 = ssub.s32 %s12, 1
      %s18 = ssub.s32 %s12, 2
      %s19 = sadd.s32 %s12, 1
      %s20 = ssub.s32 %s12, %s19
      %p21 = scmp.eq.s32.totalorder %s20, 0
      %s23 = sadd.s32 %s22, 1
      %s24 = scalar_select %p21, %s22, %s23
      %p27 = pneg %p21
      %p28 = scmp.eq.s32.totalorder %s12, 1
      %p29 = por %p27, %p28
      %p30 = scmp.ne.s32.totalorder %s22, %s25
      %p31 = scmp.eq.s32.totalorder %s12, 0
      %p32 = por %p30, %p31
      %p33 = scmp.ne.s32.totalorder %s22, %s25
      %p34 = scmp.eq.s32.totalorder %s17, 1
      %p35 = por %p33, %p34
      %p36 = scmp.ne.s32.totalorder %s25, %s26
      %p37 = scmp.eq.s32.totalorder %s17, 0
      %p38 = por %p36, %p37
      %p39 = scmp.ne.s32.totalorder %s25, %s26
      %p40 = scmp.eq.s32.totalorder %s18, 1
      %p41 = por %p39, %p40
      %p43 = scmp.ne.s32.totalorder %s26, %s42
      %p44 = scmp.eq.s32.totalorder %s18, 0
      %p45 = por %p43, %p44
      %s47 = sadd.s32 %s46, 1
      %p50 = scmp.eq.s32.totalorder %s12, 1
      %p51 = scmp.ne.s32.totalorder %s46, %s48
      %p52 = scmp.eq.s32.totalorder %s12, 0
      %p53 = por %p51, %p52
      %p54 = scmp.ne.s32.totalorder %s46, %s48
      %p55 = scmp.eq.s32.totalorder %s17, 1
      %p56 = por %p54, %p55
      %p57 = scmp.ne.s32.totalorder %s48, %s49
      %p58 = scmp.eq.s32.totalorder %s17, 0
      %p59 = por %p57, %p58
      %p60 = scmp.ne.s32.totalorder %s48, %s49
      %p61 = scmp.eq.s32.totalorder %s18, 1
      %p62 = por %p60, %p61
      %p64 = scmp.ne.s32.totalorder %s49, %s63
      %p65 = scmp.eq.s32.totalorder %s18, 0
      %p66 = por %p64, %p65
      %s68 = sadd.s32 %s67, 1
      %p71 = scmp.eq.s32.totalorder %s12, 1
      %p72 = scmp.ne.s32.totalorder %s67, %s69
      %p73 = scmp.eq.s32.totalorder %s12, 0
      %p74 = por %p72, %p73
      %p75 = scmp.ne.s32.totalorder %s67, %s69
      %p76 = scmp.eq.s32.totalorder %s17, 1
      %p77 = por %p75, %p76
      %p78 = scmp.ne.s32.totalorder %s69, %s70
      %p79 = scmp.eq.s32.totalorder %s17, 0
      %p80 = por %p78, %p79
      %p81 = scmp.ne.s32.totalorder %s69, %s70
      %p82 = scmp.eq.s32.totalorder %s18, 1
      %p83 = por %p81, %p82
      %p85 = scmp.ne.s32.totalorder %s70, %s84
      %p86 = scmp.eq.s32.totalorder %s18, 0
      %p87 = por %p85, %p86
      %s88 = ssub.s32 %s12, %s19
      %p89 = scmp.eq.s32.totalorder %s88, 0
      %s91 = sadd.s32 %s90, 1
      %s92 = scalar_select %p89, %s90, %s91
      %p95 = pneg %p89
      %p96 = scmp.eq.s32.totalorder %s12, 1
      %p97 = por %p95, %p96
      %p98 = scmp.ne.s32.totalorder %s90, %s93
      %p99 = scmp.eq.s32.totalorder %s12, 0
      %p100 = por %p98, %p99
      %p101 = scmp.ne.s32.totalorder %s90, %s93
      %p102 = scmp.eq.s32.totalorder %s17, 1
      %p103 = por %p101, %p102
      %p104 = scmp.ne.s32.totalorder %s93, %s94
      %p105 = scmp.eq.s32.totalorder %s17, 0
      %p106 = por %p104, %p105
      %p107 = scmp.ne.s32.totalorder %s93, %s94
      %p108 = scmp.eq.s32.totalorder %s18, 1
      %p109 = por %p107, %p108
      %p111 = scmp.ne.s32.totalorder %s94, %s110
      %p112 = scmp.eq.s32.totalorder %s18, 0
      %p113 = por %p111, %p112
      %p114 = scmp.le.s32.totalorder 1, %s12
      %p115 = scmp.lt.s32.totalorder %s12, 3
      %p116 = pnand %p114, %p115
      %p117 = pneg %p116
      // Predicated region
      $region9: #{net_exit1_part1l_forward.1} parent=5 // pred_check
        _
      $region10: #{net_exit1_part1l_forward.1} parent=5 // pred_check_branch
        %119 = sbr.rel (%p116) target = $region12
      $region11: #{net_exit1_part1l_forward.1} parent=5 // pred_region
        %s120 = ssub.s32 %s12, 1
        // Predicated region
        $region13: #{net_exit1_part1l_forward.1} parent=11 // pred_check
          %p121 = pneg %p59
        $region14: #{net_exit1_part1l_forward.1} parent=11 // pred_check_branch
          %123 = sbr.rel (%p121) target = $region16
        $region15: #{net_exit1_part1l_forward.1} parent=11 // pred_region
          _
        $region16: #{net_exit1_part1l_forward.1} parent=11 // pred_fallthru
          _
        // Predicated region
        $region17: #{net_exit1_part1l_forward.1} parent=11 // pred_check
          %p124 = pneg %p80
        $region18: #{net_exit1_part1l_forward.1} parent=11 // pred_check_branch
          %126 = sbr.rel (%p124) target = $region20
        $region19: #{net_exit1_part1l_forward.1} parent=11 // pred_region
          _
        $region20: #{net_exit1_part1l_forward.1} parent=11 // pred_fallthru
          _
      $region12: #{net_exit1_part1l_forward.1} parent=5 // pred_fallthru
        _
      %p127 = scmp.lt.s32.totalorder %s12, 2
      // Predicated region
      $region21: #{net_exit1_part1l_forward.1} parent=5 // pred_check
        %p128 = pneg %p127
      $region22: #{net_exit1_part1l_forward.1} parent=5 // pred_check_branch
        %130 = sbr.rel (%p128) target = $region24
      $region23: #{net_exit1_part1l_forward.1} parent=5 // pred_region
        // Predicated region
        $region25: #{net_exit1_part1l_forward.1} parent=23 // pred_check
          %p131 = pneg %p32
        $region26: #{net_exit1_part1l_forward.1} parent=23 // pred_check_branch
          %133 = sbr.rel (%p131) target = $region28
        $region27: #{net_exit1_part1l_forward.1} parent=23 // pred_region
          %p134 = scmp.lt.s32.totalorder %s12, 1
          %s135 = scalar_select %p134, %s12, 1
          %s136 = smul.addr %s135, 23
          %s137 = smul.addr %s136, 8
          %s138 = scalar_lea.vmem %s0, %s137
        $region28: #{net_exit1_part1l_forward.1} parent=23 // pred_fallthru
          _
      $region24: #{net_exit1_part1l_forward.1} parent=5 // pred_fallthru
        _
      %p139 = scmp.le.s32.totalorder 1, %s12
      %p140 = scmp.lt.s32.totalorder %s12, 3
      %p141 = pnand %p139, %p140
      %p142 = pneg %p141
      // Predicated region
      $region29: #{net_exit1_part1l_forward.1} parent=5 // pred_check
        _
      $region30: #{net_exit1_part1l_forward.1} parent=5 // pred_check_branch
        %144 = sbr.rel (%p141) target = $region32
      $region31: #{net_exit1_part1l_forward.1} parent=5 // pred_region
        %s145 = ssub.s32 %s12, 1
        %p146 = scmp.lt.s32.totalorder %s17, 1
        %s147 = scalar_select %p146, %s17, 1
        %s148 = smul.addr %s147, 23
        %s149 = smul.addr %s148, 8
        %s150 = scalar_lea.vmem %s0, %s149
        %p151 = pneg %p38
        %p152 = pneg %p35
        %p153 = pneg %p59
        %p154 = pneg %p56
        %p155 = pneg %p80
        %p156 = pneg %p77
        %p157 = pneg %p106
        %p158 = pneg %p103
        %s159 = sand.u32 %s93, 1
        %s160 = scalar_lea.sflag [#allocation5], %s159
        %s161 = sand.u32 %s93, 1
        %s162 = smul.addr %s161, 16
        %s163 = scalar_lea.vmem [#allocation4], %s162
        %p164 = scmp.lt.s32.totalorder %s17, 1
        %s165 = scalar_select %p164, %s17, 1
        %s166 = smul.addr %s165, 23
        %s167 = smul.addr %s166, 8
        %s168 = scalar_lea.vmem %s0, %s167
        %v169 = vld [vmem:[%s168] sm:$0xff]
        %v170 = vld [vmem:[%s168 + $0x8] sm:$0xff]
        %v171 = vld [vmem:[%s168 + $0x10] sm:$0xff]
        %v172 = vld [vmem:[%s168 + $0x18] sm:$0xff]
        %v173 = vld [vmem:[%s168 + $0x20] sm:$0xff]
        %v174 = vld [vmem:[%s168 + $0x28] sm:$0xff]
        %v175 = vld [vmem:[%s168 + $0x30] sm:$0xff]
        %v176 = vld [vmem:[%s168 + $0x38] sm:$0xff]
        %v177 = vld [vmem:[%s168 + $0x40] sm:$0xff]
        %v178 = vld [vmem:[%s168 + $0x48] sm:$0xff]
        %v179 = vld [vmem:[%s168 + $0x50] sm:$0xff]
        %v180 = vld [vmem:[%s168 + $0x58] sm:$0xff]
        %v181 = vld [vmem:[%s168 + $0x60] sm:$0xff]
        %v182 = vld [vmem:[%s168 + $0x68] sm:$0xff]
        %v183 = vld [vmem:[%s168 + $0x70] sm:$0xff]
        %v184 = vld [vmem:[%s168 + $0x78] sm:$0xff]
        %v185 = vld [vmem:[%s168 + $0x80] sm:$0xff]
        %v186 = vld [vmem:[%s168 + $0x88] sm:$0xff]
        %v187 = vld [vmem:[%s168 + $0x90] sm:$0xff]
        %v188 = vld [vmem:[%s168 + $0x98] sm:$0xff]
        %v189 = vld [vmem:[%s168 + $0xa0] sm:$0xff]
        %v190 = vld [vmem:[%s168 + $0xa8] sm:$0xff]
        %vm191 = vcmask 261120
        %192 = vst.msk [vmem:[#allocation2] sm:$0xff] %vm191, %v169
        %193 = vst.msk [vmem:[#allocation2 + $0x8] sm:$0xff] %vm191, %v170
        %194 = vst.msk [vmem:[#allocation2 + $0x10] sm:$0xff] %vm191, %v171
        %195 = vst.msk [vmem:[#allocation2 + $0x18] sm:$0xff] %vm191, %v172
        %196 = vst.msk [vmem:[#allocation2 + $0x20] sm:$0xff] %vm191, %v173
        %197 = vst.msk [vmem:[#allocation2 + $0x28] sm:$0xff] %vm191, %v174
        %198 = vst.msk [vmem:[#allocation2 + $0x30] sm:$0xff] %vm191, %v175
        %199 = vst.msk [vmem:[#allocation2 + $0x38] sm:$0xff] %vm191, %v176
        %200 = vst.msk [vmem:[#allocation2 + $0x40] sm:$0xff] %vm191, %v177
        %201 = vst.msk [vmem:[#allocation2 + $0x48] sm:$0xff] %vm191, %v178
        %202 = vst.msk [vmem:[#allocation2 + $0x50] sm:$0xff] %vm191, %v179
        %203 = vst.msk [vmem:[#allocation2 + $0x58] sm:$0xff] %vm191, %v180
        %204 = vst.msk [vmem:[#allocation2 + $0x60] sm:$0xff] %vm191, %v181
        %205 = vst.msk [vmem:[#allocation2 + $0x68] sm:$0xff] %vm191, %v182
        %206 = vst.msk [vmem:[#allocation2 + $0x70] sm:$0xff] %vm191, %v183
        %207 = vst.msk [vmem:[#allocation2 + $0x78] sm:$0xff] %vm191, %v184
        %208 = vst.msk [vmem:[#allocation2 + $0x80] sm:$0xff] %vm191, %v185
        %209 = vst.msk [vmem:[#allocation2 + $0x88] sm:$0xff] %vm191, %v186
        %210 = vst.msk [vmem:[#allocation2 + $0x90] sm:$0xff] %vm191, %v187
        %211 = vst.msk [vmem:[#allocation2 + $0x98] sm:$0xff] %vm191, %v188
        %212 = vst.msk [vmem:[#allocation2 + $0xa0] sm:$0xff] %vm191, %v189
        %213 = vst.msk [vmem:[#allocation2 + $0xa8] sm:$0xff] %vm191, %v190
        %v214 = vld [vmem:[%s168 + $0x1] sm:$0xff]
        %v215 = vld [vmem:[%s168 + $0x9] sm:$0xff]
        %v216 = vld [vmem:[%s168 + $0x11] sm:$0xff]
        %v217 = vld [vmem:[%s168 + $0x19] sm:$0xff]
        %v218 = vld [vmem:[%s168 + $0x21] sm:$0xff]
        %v219 = vld [vmem:[%s168 + $0x29] sm:$0xff]
        %v220 = vld [vmem:[%s168 + $0x31] sm:$0xff]
        %v221 = vld [vmem:[%s168 + $0x39] sm:$0xff]
        %v222 = vld [vmem:[%s168 + $0x41] sm:$0xff]
        %v223 = vld [vmem:[%s168 + $0x49] sm:$0xff]
        %v224 = vld [vmem:[%s168 + $0x51] sm:$0xff]
        %v225 = vld [vmem:[%s168 + $0x59] sm:$0xff]
        %v226 = vld [vmem:[%s168 + $0x61] sm:$0xff]
        %v227 = vld [vmem:[%s168 + $0x69] sm:$0xff]
        %v228 = vld [vmem:[%s168 + $0x71] sm:$0xff]
        %v229 = vld [vmem:[%s168 + $0x79] sm:$0xff]
        %v230 = vld [vmem:[%s168 + $0x81] sm:$0xff]
        %v231 = vld [vmem:[%s168 + $0x89] sm:$0xff]
        %v232 = vld [vmem:[%s168 + $0x91] sm:$0xff]
        %v233 = vld [vmem:[%s168 + $0x99] sm:$0xff]
        %v234 = vld [vmem:[%s168 + $0xa1] sm:$0xff]
        %v235 = vld [vmem:[%s168 + $0xa9] sm:$0xff]
        %258 = vrot.lane.b32.xlu0 %v214, 32
        %v259 = vpop.permute.xlu0 %258
        %260 = vrot.lane.b32.xlu0 %v215, 32
        %v261 = vpop.permute.xlu0 %260
        %262 = vrot.lane.b32.xlu0 %v216, 32
        %v263 = vpop.permute.xlu0 %262
        %264 = vrot.lane.b32.xlu0 %v217, 32
        %v265 = vpop.permute.xlu0 %264
        %266 = vrot.lane.b32.xlu0 %v218, 32
        %v267 = vpop.permute.xlu0 %266
        %268 = vrot.lane.b32.xlu0 %v219, 32
        %v269 = vpop.permute.xlu0 %268
        %270 = vrot.lane.b32.xlu0 %v220, 32
        %v271 = vpop.permute.xlu0 %270
        %272 = vrot.lane.b32.xlu0 %v221, 32
        %v273 = vpop.permute.xlu0 %272
        %274 = vrot.lane.b32.xlu0 %v222, 32
        %v275 = vpop.permute.xlu0 %274
        %276 = vrot.lane.b32.xlu0 %v223, 32
        %v277 = vpop.permute.xlu0 %276
        %278 = vrot.lane.b32.xlu0 %v224, 32
        %v279 = vpop.permute.xlu0 %278
        %280 = vrot.lane.b32.xlu0 %v225, 32
        %v281 = vpop.permute.xlu0 %280
        %282 = vrot.lane.b32.xlu0 %v226, 32
        %v283 = vpop.permute.xlu0 %282
        %284 = vrot.lane.b32.xlu0 %v227, 32
        %v285 = vpop.permute.xlu0 %284
        %286 = vrot.lane.b32.xlu0 %v228, 32
        %v287 = vpop.permute.xlu0 %286
        %288 = vrot.lane.b32.xlu0 %v229, 32
        %v289 = vpop.permute.xlu0 %288
        %290 = vrot.lane.b32.xlu0 %v230, 32
        %v291 = vpop.permute.xlu0 %290
        %292 = vrot.lane.b32.xlu0 %v231, 32
        %v293 = vpop.permute.xlu0 %292
        %294 = vrot.lane.b32.xlu0 %v232, 32
        %v295 = vpop.permute.xlu0 %294
        %296 = vrot.lane.b32.xlu0 %v233, 32
        %v297 = vpop.permute.xlu0 %296
        %298 = vrot.lane.b32.xlu0 %v234, 32
        %v299 = vpop.permute.xlu0 %298
        %300 = vrot.lane.b32.xlu0 %v235, 32
        %v301 = vpop.permute.xlu0 %300
        %vm324 = vcmask 523520
        %325 = vst.msk [vmem:[#allocation2] sm:$0xff] %vm324, %v259
        %326 = vst.msk [vmem:[#allocation2 + $0x8] sm:$0xff] %vm324, %v261
        %327 = vst.msk [vmem:[#allocation2 + $0x10] sm:$0xff] %vm324, %v263
        %328 = vst.msk [vmem:[#allocation2 + $0x18] sm:$0xff] %vm324, %v265
        %329 = vst.msk [vmem:[#allocation2 + $0x20] sm:$0xff] %vm324, %v267
        %330 = vst.msk [vmem:[#allocation2 + $0x28] sm:$0xff] %vm324, %v269
        %331 = vst.msk [vmem:[#allocation2 + $0x30] sm:$0xff] %vm324, %v271
        %332 = vst.msk [vmem:[#allocation2 + $0x38] sm:$0xff] %vm324, %v273
        %333 = vst.msk [vmem:[#allocation2 + $0x40] sm:$0xff] %vm324, %v275
        %334 = vst.msk [vmem:[#allocation2 + $0x48] sm:$0xff] %vm324, %v277
        %335 = vst.msk [vmem:[#allocation2 + $0x50] sm:$0xff] %vm324, %v279
        %336 = vst.msk [vmem:[#allocation2 + $0x58] sm:$0xff] %vm324, %v281
        %337 = vst.msk [vmem:[#allocation2 + $0x60] sm:$0xff] %vm324, %v283
        %338 = vst.msk [vmem:[#allocation2 + $0x68] sm:$0xff] %vm324, %v285
        %339 = vst.msk [vmem:[#allocation2 + $0x70] sm:$0xff] %vm324, %v287
        %340 = vst.msk [vmem:[#allocation2 + $0x78] sm:$0xff] %vm324, %v289
        %341 = vst.msk [vmem:[#allocation2 + $0x80] sm:$0xff] %vm324, %v291
        %342 = vst.msk [vmem:[#allocation2 + $0x88] sm:$0xff] %vm324, %v293
        %343 = vst.msk [vmem:[#allocation2 + $0x90] sm:$0xff] %vm324, %v295
        %344 = vst.msk [vmem:[#allocation2 + $0x98] sm:$0xff] %vm324, %v297
        %345 = vst.msk [vmem:[#allocation2 + $0xa0] sm:$0xff] %vm324, %v299
        %346 = vst.msk [vmem:[#allocation2 + $0xa8] sm:$0xff] %vm324, %v301
        %v347 = vld [vmem:[%s168 + $0x2] sm:$0xff]
        %v348 = vld [vmem:[%s168 + $0xa] sm:$0xff]
        %v349 = vld [vmem:[%s168 + $0x12] sm:$0xff]
        %v350 = vld [vmem:[%s168 + $0x1a] sm:$0xff]
        %v351 = vld [vmem:[%s168 + $0x22] sm:$0xff]
        %v352 = vld [vmem:[%s168 + $0x2a] sm:$0xff]
        %v353 = vld [vmem:[%s168 + $0x32] sm:$0xff]
        %v354 = vld [vmem:[%s168 + $0x3a] sm:$0xff]
        %v355 = vld [vmem:[%s168 + $0x42] sm:$0xff]
        %v356 = vld [vmem:[%s168 + $0x4a] sm:$0xff]
        %v357 = vld [vmem:[%s168 + $0x52] sm:$0xff]
        %v358 = vld [vmem:[%s168 + $0x5a] sm:$0xff]
        %v359 = vld [vmem:[%s168 + $0x62] sm:$0xff]
        %v360 = vld [vmem:[%s168 + $0x6a] sm:$0xff]
        %v361 = vld [vmem:[%s168 + $0x72] sm:$0xff]
        %v362 = vld [vmem:[%s168 + $0x7a] sm:$0xff]
        %v363 = vld [vmem:[%s168 + $0x82] sm:$0xff]
        %v364 = vld [vmem:[%s168 + $0x8a] sm:$0xff]
        %v365 = vld [vmem:[%s168 + $0x92] sm:$0xff]
        %v366 = vld [vmem:[%s168 + $0x9a] sm:$0xff]
        %v367 = vld [vmem:[%s168 + $0xa2] sm:$0xff]
        %v368 = vld [vmem:[%s168 + $0xaa] sm:$0xff]
        %391 = vrot.lane.b32.xlu0 %v347, 64
        %v392 = vpop.permute.xlu0 %391
        %393 = vrot.lane.b32.xlu0 %v348, 64
        %v394 = vpop.permute.xlu0 %393
        %395 = vrot.lane.b32.xlu0 %v349, 64
        %v396 = vpop.permute.xlu0 %395
        %397 = vrot.lane.b32.xlu0 %v350, 64
        %v398 = vpop.permute.xlu0 %397
        %399 = vrot.lane.b32.xlu0 %v351, 64
        %v400 = vpop.permute.xlu0 %399
        %401 = vrot.lane.b32.xlu0 %v352, 64
        %v402 = vpop.permute.xlu0 %401
        %403 = vrot.lane.b32.xlu0 %v353, 64
        %v404 = vpop.permute.xlu0 %403
        %405 = vrot.lane.b32.xlu0 %v354, 64
        %v406 = vpop.permute.xlu0 %405
        %407 = vrot.lane.b32.xlu0 %v355, 64
        %v408 = vpop.permute.xlu0 %407
        %409 = vrot.lane.b32.xlu0 %v356, 64
        %v410 = vpop.permute.xlu0 %409
        %411 = vrot.lane.b32.xlu0 %v357, 64
        %v412 = vpop.permute.xlu0 %411
        %413 = vrot.lane.b32.xlu0 %v358, 64
        %v414 = vpop.permute.xlu0 %413
        %415 = vrot.lane.b32.xlu0 %v359, 64
        %v416 = vpop.permute.xlu0 %415
        %417 = vrot.lane.b32.xlu0 %v360, 64
        %v418 = vpop.permute.xlu0 %417
        %419 = vrot.lane.b32.xlu0 %v361, 64
        %v420 = vpop.permute.xlu0 %419
        %421 = vrot.lane.b32.xlu0 %v362, 64
        %v422 = vpop.permute.xlu0 %421
        %423 = vrot.lane.b32.xlu0 %v363, 64
        %v424 = vpop.permute.xlu0 %423
        %425 = vrot.lane.b32.xlu0 %v364, 64
        %v426 = vpop.permute.xlu0 %425
        %427 = vrot.lane.b32.xlu0 %v365, 64
        %v428 = vpop.permute.xlu0 %427
        %429 = vrot.lane.b32.xlu0 %v366, 64
        %v430 = vpop.permute.xlu0 %429
        %431 = vrot.lane.b32.xlu0 %v367, 64
        %v432 = vpop.permute.xlu0 %431
        %433 = vrot.lane.b32.xlu0 %v368, 64
        %v434 = vpop.permute.xlu0 %433
        %vm457 = vcmask 785920
        %458 = vst.msk [vmem:[#allocation2] sm:$0xff] %vm457, %v392
        %459 = vst.msk [vmem:[#allocation2 + $0x8] sm:$0xff] %vm457, %v394
        %460 = vst.msk [vmem:[#allocation2 + $0x10] sm:$0xff] %vm457, %v396
        %461 = vst.msk [vmem:[#allocation2 + $0x18] sm:$0xff] %vm457, %v398
        %462 = vst.msk [vmem:[#allocation2 + $0x20] sm:$0xff] %vm457, %v400
        %463 = vst.msk [vmem:[#allocation2 + $0x28] sm:$0xff] %vm457, %v402
        %464 = vst.msk [vmem:[#allocation2 + $0x30] sm:$0xff] %vm457, %v404
        %465 = vst.msk [vmem:[#allocation2 + $0x38] sm:$0xff] %vm457, %v406
        %466 = vst.msk [vmem:[#allocation2 + $0x40] sm:$0xff] %vm457, %v408
        %467 = vst.msk [vmem:[#allocation2 + $0x48] sm:$0xff] %vm457, %v410
        %468 = vst.msk [vmem:[#allocation2 + $0x50] sm:$0xff] %vm457, %v412
        %469 = vst.msk [vmem:[#allocation2 + $0x58] sm:$0xff] %vm457, %v414
        %470 = vst.msk [vmem:[#allocation2 + $0x60] sm:$0xff] %vm457, %v416
        %471 = vst.msk [vmem:[#allocation2 + $0x68] sm:$0xff] %vm457, %v418
        %472 = vst.msk [vmem:[#allocation2 + $0x70] sm:$0xff] %vm457, %v420
        %473 = vst.msk [vmem:[#allocation2 + $0x78] sm:$0xff] %vm457, %v422
        %474 = vst.msk [vmem:[#allocation2 + $0x80] sm:$0xff] %vm457, %v424
        %475 = vst.msk [vmem:[#allocation2 + $0x88] sm:$0xff] %vm457, %v426
        %476 = vst.msk [vmem:[#allocation2 + $0x90] sm:$0xff] %vm457, %v428
        %477 = vst.msk [vmem:[#allocation2 + $0x98] sm:$0xff] %vm457, %v430
        %478 = vst.msk [vmem:[#allocation2 + $0xa0] sm:$0xff] %vm457, %v432
        %479 = vst.msk [vmem:[#allocation2 + $0xa8] sm:$0xff] %vm457, %v434
        %v480 = vld [vmem:[%s168 + $0x3] sm:$0xff]
        %v481 = vld [vmem:[%s168 + $0xb] sm:$0xff]
        %v482 = vld [vmem:[%s168 + $0x13] sm:$0xff]
        %v483 = vld [vmem:[%s168 + $0x1b] sm:$0xff]
        %v484 = vld [vmem:[%s168 + $0x23] sm:$0xff]
        %v485 = vld [vmem:[%s168 + $0x2b] sm:$0xff]
        %v486 = vld [vmem:[%s168 + $0x33] sm:$0xff]
        %v487 = vld [vmem:[%s168 + $0x3b] sm:$0xff]
        %v488 = vld [vmem:[%s168 + $0x43] sm:$0xff]
        %v489 = vld [vmem:[%s168 + $0x4b] sm:$0xff]
        %v490 = vld [vmem:[%s168 + $0x53] sm:$0xff]
        %v491 = vld [vmem:[%s168 + $0x5b] sm:$0xff]
        %v492 = vld [vmem:[%s168 + $0x63] sm:$0xff]
        %v493 = vld [vmem:[%s168 + $0x6b] sm:$0xff]
        %v494 = vld [vmem:[%s168 + $0x73] sm:$0xff]
        %v495 = vld [vmem:[%s168 + $0x7b] sm:$0xff]
        %v496 = vld [vmem:[%s168 + $0x83] sm:$0xff]
        %v497 = vld [vmem:[%s168 + $0x8b] sm:$0xff]
        %v498 = vld [vmem:[%s168 + $0x93] sm:$0xff]
        %v499 = vld [vmem:[%s168 + $0x9b] sm:$0xff]
        %v500 = vld [vmem:[%s168 + $0xa3] sm:$0xff]
        %v501 = vld [vmem:[%s168 + $0xab] sm:$0xff]
        %524 = vrot.lane.b32.xlu0 %v480, 96
        %v525 = vpop.permute.xlu0 %524
        %526 = vrot.lane.b32.xlu0 %v481, 96
        %v527 = vpop.permute.xlu0 %526
        %528 = vrot.lane.b32.xlu0 %v482, 96
        %v529 = vpop.permute.xlu0 %528
        %530 = vrot.lane.b32.xlu0 %v483, 96
        %v531 = vpop.permute.xlu0 %530
        %532 = vrot.lane.b32.xlu0 %v484, 96
        %v533 = vpop.permute.xlu0 %532
        %534 = vrot.lane.b32.xlu0 %v485, 96
        %v535 = vpop.permute.xlu0 %534
        %536 = vrot.lane.b32.xlu0 %v486, 96
        %v537 = vpop.permute.xlu0 %536
        %538 = vrot.lane.b32.xlu0 %v487, 96
        %v539 = vpop.permute.xlu0 %538
        %540 = vrot.lane.b32.xlu0 %v488, 96
        %v541 = vpop.permute.xlu0 %540
        %542 = vrot.lane.b32.xlu0 %v489, 96
        %v543 = vpop.permute.xlu0 %542
        %544 = vrot.lane.b32.xlu0 %v490, 96
        %v545 = vpop.permute.xlu0 %544
        %546 = vrot.lane.b32.xlu0 %v491, 96
        %v547 = vpop.permute.xlu0 %546
        %548 = vrot.lane.b32.xlu0 %v492, 96
        %v549 = vpop.permute.xlu0 %548
        %550 = vrot.lane.b32.xlu0 %v493, 96
        %v551 = vpop.permute.xlu0 %550
        %552 = vrot.lane.b32.xlu0 %v494, 96
        %v553 = vpop.permute.xlu0 %552
        %554 = vrot.lane.b32.xlu0 %v495, 96
        %v555 = vpop.permute.xlu0 %554
        %556 = vrot.lane.b32.xlu0 %v496, 96
        %v557 = vpop.permute.xlu0 %556
        %558 = vrot.lane.b32.xlu0 %v497, 96
        %v559 = vpop.permute.xlu0 %558
        %560 = vrot.lane.b32.xlu0 %v498, 96
        %v561 = vpop.permute.xlu0 %560
        %562 = vrot.lane.b32.xlu0 %v499, 96
        %v563 = vpop.permute.xlu0 %562
        %564 = vrot.lane.b32.xlu0 %v500, 96
        %v565 = vpop.permute.xlu0 %564
        %566 = vrot.lane.b32.xlu0 %v501, 96
        %v567 = vpop.permute.xlu0 %566
        %vm590 = vcmask 1048320
        %591 = vst.msk [vmem:[#allocation2] sm:$0xff] %vm590, %v525
        %592 = vst.msk [vmem:[#allocation2 + $0x8] sm:$0xff] %vm590, %v527
        %593 = vst.msk [vmem:[#allocation2 + $0x10] sm:$0xff] %vm590, %v529
        %594 = vst.msk [vmem:[#allocation2 + $0x18] sm:$0xff] %vm590, %v531
        %595 = vst.msk [vmem:[#allocation2 + $0x20] sm:$0xff] %vm590, %v533
        %596 = vst.msk [vmem:[#allocation2 + $0x28] sm:$0xff] %vm590, %v535
        %597 = vst.msk [vmem:[#allocation2 + $0x30] sm:$0xff] %vm590, %v537
        %598 = vst.msk [vmem:[#allocation2 + $0x38] sm:$0xff] %vm590, %v539
        %599 = vst.msk [vmem:[#allocation2 + $0x40] sm:$0xff] %vm590, %v541
        %600 = vst.msk [vmem:[#allocation2 + $0x48] sm:$0xff] %vm590, %v543
        %601 = vst.msk [vmem:[#allocation2 + $0x50] sm:$0xff] %vm590, %v545
        %602 = vst.msk [vmem:[#allocation2 + $0x58] sm:$0xff] %vm590, %v547
        %603 = vst.msk [vmem:[#allocation2 + $0x60] sm:$0xff] %vm590, %v549
        %604 = vst.msk [vmem:[#allocation2 + $0x68] sm:$0xff] %vm590, %v551
        %605 = vst.msk [vmem:[#allocation2 + $0x70] sm:$0xff] %vm590, %v553
        %606 = vst.msk [vmem:[#allocation2 + $0x78] sm:$0xff] %vm590, %v555
        %607 = vst.msk [vmem:[#allocation2 + $0x80] sm:$0xff] %vm590, %v557
        %608 = vst.msk [vmem:[#allocation2 + $0x88] sm:$0xff] %vm590, %v559
        %609 = vst.msk [vmem:[#allocation2 + $0x90] sm:$0xff] %vm590, %v561
        %610 = vst.msk [vmem:[#allocation2 + $0x98] sm:$0xff] %vm590, %v563
        %611 = vst.msk [vmem:[#allocation2 + $0xa0] sm:$0xff] %vm590, %v565
        %612 = vst.msk [vmem:[#allocation2 + $0xa8] sm:$0xff] %vm590, %v567
        %v613 = vld [vmem:[#allocation2] sm:$0xff]
        %v614 = vld [vmem:[#allocation2 + $0x8] sm:$0xff]
        %v615 = vld [vmem:[#allocation2 + $0x10] sm:$0xff]
        %v616 = vld [vmem:[#allocation2 + $0x18] sm:$0xff]
        %v617 = vld [vmem:[#allocation2 + $0x20] sm:$0xff]
        %v618 = vld [vmem:[#allocation2 + $0x28] sm:$0xff]
        %v619 = vld [vmem:[#allocation2 + $0x30] sm:$0xff]
        %v620 = vld [vmem:[#allocation2 + $0x38] sm:$0xff]
        %v621 = vld [vmem:[#allocation2 + $0x40] sm:$0xff]
        %v622 = vld [vmem:[#allocation2 + $0x48] sm:$0xff]
        %v623 = vld [vmem:[#allocation2 + $0x50] sm:$0xff]
        %v624 = vld [vmem:[#allocation2 + $0x58] sm:$0xff]
        %v625 = vld [vmem:[#allocation2 + $0x60] sm:$0xff]
        %v626 = vld [vmem:[#allocation2 + $0x68] sm:$0xff]
        %v627 = vld [vmem:[#allocation2 + $0x70] sm:$0xff]
        %v628 = vld [vmem:[#allocation2 + $0x78] sm:$0xff]
        %v629 = vld [vmem:[%s1] sm:$0xff]
        %v630 = vld [vmem:[%s1 + $0x8] sm:$0xff]
        %v631 = vld [vmem:[%s1 + $0x10] sm:$0xff]
        %v632 = vld [vmem:[%s1 + $0x18] sm:$0xff]
        %v633 = vld [vmem:[%s1 + $0x20] sm:$0xff]
        %v634 = vld [vmem:[%s1 + $0x28] sm:$0xff]
        %v635 = vld [vmem:[%s1 + $0x30] sm:$0xff]
        %v636 = vld [vmem:[%s1 + $0x38] sm:$0xff]
        %v637 = vld [vmem:[%s1 + $0x40] sm:$0xff]
        %v638 = vld [vmem:[%s1 + $0x48] sm:$0xff]
        %v639 = vld [vmem:[%s1 + $0x50] sm:$0xff]
        %v640 = vld [vmem:[%s1 + $0x58] sm:$0xff]
        %v641 = vld [vmem:[%s1 + $0x60] sm:$0xff]
        %v642 = vld [vmem:[%s1 + $0x68] sm:$0xff]
        %v643 = vld [vmem:[%s1 + $0x70] sm:$0xff]
        %v644 = vld [vmem:[%s1 + $0x78] sm:$0xff]
        %v645 = vld [vmem:[#allocation2 + $0x80] sm:$0xff]
        %v646 = vld [vmem:[#allocation2 + $0x88] sm:$0xff]
        %s647 = scalar_lea.vmem %s1, 128
        %v648 = vld [vmem:[%s647] sm:$0xff]
        %v649 = vld [vmem:[%s647 + $0x8] sm:$0xff]
        %v650 = vld [vmem:[%s647 + $0x10] sm:$0xff]
        %v651 = vld [vmem:[%s647 + $0x18] sm:$0xff]
        %v652 = vld [vmem:[%s647 + $0x20] sm:$0xff]
        %v653 = vld [vmem:[%s647 + $0x28] sm:$0xff]
        %v654 = vld [vmem:[%s647 + $0x30] sm:$0xff]
        %v655 = vld [vmem:[%s647 + $0x38] sm:$0xff]
        %v656 = vld [vmem:[%s647 + $0x40] sm:$0xff]
        %v657 = vld [vmem:[%s647 + $0x48] sm:$0xff]
        %v658 = vld [vmem:[%s647 + $0x50] sm:$0xff]
        %v659 = vld [vmem:[%s647 + $0x58] sm:$0xff]
        %v660 = vld [vmem:[%s647 + $0x60] sm:$0xff]
        %v661 = vld [vmem:[%s647 + $0x68] sm:$0xff]
        %v662 = vld [vmem:[%s647 + $0x70] sm:$0xff]
        %v663 = vld [vmem:[%s647 + $0x78] sm:$0xff]
        %664 = vmatprep.subr.mxu0 0.0
        %665 = vmatpush1.msra.mxu0 %v648
        %666 = vmatprep.subr.mxu0 0.0
        %667 = vmatpush1.msra.mxu0 %v649
        %668 = vmatprep.subr.mxu0 0.0
        %669 = vmatpush1.msra.mxu0 %v650
        %670 = vmatprep.subr.mxu0 0.0
        %671 = vmatpush1.msra.mxu0 %v651
        %672 = vmatprep.subr.mxu0 0.0
        %673 = vmatpush1.msra.mxu0 %v652
        %674 = vmatprep.subr.mxu0 0.0
        %675 = vmatpush1.msra.mxu0 %v653
        %676 = vmatprep.subr.mxu0 0.0
        %677 = vmatpush1.msra.mxu0 %v654
        %678 = vmatprep.subr.mxu0 0.0
        %679 = vmatpush1.msra.mxu0 %v655
        %680 = vmatprep.subr.mxu0 0.0
        %681 = vmatpush1.msra.mxu0 %v656
        %682 = vmatprep.subr.mxu0 0.0
        %683 = vmatpush1.msra.mxu0 %v657
        %684 = vmatprep.subr.mxu0 0.0
        %685 = vmatpush1.msra.mxu0 %v658
        %686 = vmatprep.subr.mxu0 0.0
        %687 = vmatpush1.msra.mxu0 %v659
        %688 = vmatprep.subr.mxu0 0.0
        %689 = vmatpush1.msra.mxu0 %v660
        %690 = vmatprep.subr.mxu0 0.0
        %691 = vmatpush1.msra.mxu0 %v661
        %692 = vmatprep.subr.mxu0 0.0
        %693 = vmatpush1.msra.mxu0 %v662
        %694 = vmatprep.subr.mxu0 0.0
        %695 = vmatpush1.msra.mxu0 %v663
        %696 = vmatprep.subr.mxu0 0.0
        %697 = vmatpush1.msra.mxu0 0.0
        %698 = vmatprep.subr.mxu0 0.0
        %699 = vmatpush1.msra.mxu0 0.0
        %700 = vmatprep.subr.mxu0 0.0
        %701 = vmatpush1.msra.mxu0 0.0
        %702 = vmatprep.subr.mxu0 0.0
        %703 = vmatpush1.msra.mxu0 0.0
        %704 = vmatprep.subr.mxu0 0.0
        %705 = vmatpush1.msra.mxu0 0.0
        %706 = vmatprep.subr.mxu0 0.0
        %707 = vmatpush1.msra.mxu0 0.0
        %708 = vmatprep.subr.mxu0 0.0
        %709 = vmatpush1.msra.mxu0 0.0
        %710 = vmatprep.subr.mxu0 0.0
        %711 = vmatpush1.msra.mxu0 0.0
        %712 = vmatprep.subr.mxu0 0.0
        %713 = vmatpush1.msra.mxu0 0.0
        %714 = vmatprep.subr.mxu0 0.0
        %715 = vmatpush1.msra.mxu0 0.0
        %716 = vmatprep.subr.mxu0 0.0
        %717 = vmatpush1.msra.mxu0 0.0
        %718 = vmatprep.subr.mxu0 0.0
        %719 = vmatpush1.msra.mxu0 0.0
        %720 = vmatprep.subr.mxu0 0.0
        %721 = vmatpush1.msra.mxu0 0.0
        %722 = vmatprep.subr.mxu0 0.0
        %723 = vmatpush1.msra.mxu0 0.0
        %724 = vmatprep.subr.mxu0 0.0
        %725 = vmatpush1.msra.mxu0 0.0
        %726 = vmatprep.subr.mxu0 0.0
        %727 = vmatpush1.msra.mxu0 0.0
        %728 = vmatprep.mubr.f32.mxu0 0.0
        %729 = vmatmul.mubr.f32.gmra.mrb[0].mxu0 %v615
        %v730 = vpop.f32.mrb[0].mxu0
        %v731 = vadd.f32 0.0, %v730
        %v732 = vpop.f32.mrb[0].mxu0
        %733 = vmatprep.mubr.f32.mxu0 0.0
        %734 = vmatmul.mubr.f32.gmra.mrb[0].mxu0 %v616
        %v735 = vpop.f32.mrb[0].mxu0
        %v736 = vadd.f32 0.0, %v735
        %v737 = vpop.f32.mrb[0].mxu0
        %738 = vmatprep.mubr.f32.mxu0 0.0
        %739 = vmatmul.mubr.f32.gmra.mrb[0].mxu0 %v617
        %v740 = vpop.f32.mrb[0].mxu0
        %v741 = vadd.f32 0.0, %v740
        %v742 = vpop.f32.mrb[0].mxu0
        %743 = vmatprep.mubr.f32.mxu0 0.0
        %744 = vmatmul.mubr.f32.gmra.mrb[0].mxu0 %v618
        %v745 = vpop.f32.mrb[0].mxu0
        %v746 = vadd.f32 0.0, %v745
        %v747 = vpop.f32.mrb[0].mxu0
        %748 = vmatprep.mubr.f32.mxu0 0.0
        %749 = vmatmul.mubr.f32.gmra.mrb[0].mxu0 %v619
        %v750 = vpop.f32.mrb[0].mxu0
        %v751 = vadd.f32 0.0, %v750
        %v752 = vpop.f32.mrb[0].mxu0
        %753 = vmatprep.mubr.f32.mxu0 0.0
        %754 = vmatmul.mubr.f32.gmra.mrb[0].mxu0 %v620
        %v755 = vpop.f32.mrb[0].mxu0
        %v756 = vadd.f32 0.0, %v755
        %v757 = vpop.f32.mrb[0].mxu0
        %758 = vmatprep.mubr.f32.mxu0 0.0
        %759 = vmatmul.mubr.f32.gmra.mrb[0].mxu0 %v621
        %v760 = vpop.f32.mrb[0].mxu0
        %v761 = vadd.f32 0.0, %v760
        %v762 = vpop.f32.mrb[0].mxu0
        %763 = vmatprep.mubr.f32.mxu0 0.0
        %764 = vmatmul.mubr.f32.gmra.mrb[0].mxu0 %v622
        %v765 = vpop.f32.mrb[0].mxu0
        %v766 = vadd.f32 0.0, %v765
        %v767 = vpop.f32.mrb[0].mxu0
        %768 = vmatprep.mubr.f32.mxu0 0.0
        %769 = vmatmul.mubr.f32.gmra.mrb[0].mxu0 %v623
        %v770 = vpop.f32.mrb[0].mxu0
        %v771 = vadd.f32 0.0, %v770
        %v772 = vpop.f32.mrb[0].mxu0
        %773 = vmatprep.mubr.f32.mxu0 0.0
        %774 = vmatmul.mubr.f32.gmra.mrb[0].mxu0 %v624
        %v775 = vpop.f32.mrb[0].mxu0
        %v776 = vadd.f32 0.0, %v775
        %v777 = vpop.f32.mrb[0].mxu0
        %778 = vmatprep.mubr.f32.mxu0 0.0
        %779 = vmatmul.mubr.f32.gmra.mrb[0].mxu0 %v625
        %v780 = vpop.f32.mrb[0].mxu0
        %v781 = vadd.f32 0.0, %v780
        %v782 = vpop.f32.mrb[0].mxu0
        %783 = vmatprep.mubr.f32.mxu0 0.0
        %784 = vmatmul.mubr.f32.gmra.mrb[0].mxu0 %v626
        %v785 = vpop.f32.mrb[0].mxu0
        %v786 = vadd.f32 0.0, %v785
        %v787 = vpop.f32.mrb[0].mxu0
        %788 = vmatprep.mubr.f32.mxu0 0.0
        %789 = vmatmul.mubr.f32.gmra.mrb[0].mxu0 %v627
        %v790 = vpop.f32.mrb[0].mxu0
        %v791 = vadd.f32 0.0, %v790
        %v792 = vpop.f32.mrb[0].mxu0
        %793 = vmatprep.mubr.f32.mxu0 0.0
        %794 = vmatmul.mubr.f32.gmra.mrb[0].mxu0 %v628
        %v795 = vpop.f32.mrb[0].mxu0
        %v796 = vadd.f32 0.0, %v795
        %v797 = vpop.f32.mrb[0].mxu0
        %798 = vmatprep.mubr.f32.mxu0 0.0
        %799 = vmatmul.mubr.f32.gmra.mrb[0].mxu0 %v645
        %v800 = vpop.f32.mrb[0].mxu0
        %v801 = vadd.f32 0.0, %v800
        %v802 = vpop.f32.mrb[0].mxu0
        %803 = vmatprep.mubr.f32.mxu0 0.0
        %804 = vmatmul.mubr.f32.gmra.mrb[0].mxu0 %v646
        %v805 = vpop.f32.mrb[0].mxu0
        %v806 = vadd.f32 0.0, %v805
        %v807 = vpop.f32.mrb[0].mxu0
        %808 = vdwg.mxu0
        %809 = vmatprep.subr.mxu0 0.0
        %810 = vmatpush1.msra.mxu0 %v629
        %811 = vmatprep.subr.mxu0 0.0
        %812 = vmatpush1.msra.mxu0 %v630
        %813 = vmatprep.subr.mxu0 0.0
        %814 = vmatpush1.msra.mxu0 %v631
        %815 = vmatprep.subr.mxu0 0.0
        %816 = vmatpush1.msra.mxu0 %v632
        %817 = vmatprep.subr.mxu0 0.0
        %818 = vmatpush1.msra.mxu0 %v633
        %819 = vmatprep.subr.mxu0 0.0
        %820 = vmatpush1.msra.mxu0 %v634
        %821 = vmatprep.subr.mxu0 0.0
        %822 = vmatpush1.msra.mxu0 %v635
        %823 = vmatprep.subr.mxu0 0.0
        %824 = vmatpush1.msra.mxu0 %v636
        %825 = vmatprep.subr.mxu0 0.0
        %826 = vmatpush1.msra.mxu0 %v637
        %827 = vmatprep.subr.mxu0 0.0
        %828 = vmatpush1.msra.mxu0 %v638
        %829 = vmatprep.subr.mxu0 0.0
        %830 = vmatpush1.msra.mxu0 %v639
        %831 = vmatprep.subr.mxu0 0.0
        %832 = vmatpush1.msra.mxu0 %v640
        %833 = vmatprep.subr.mxu0 0.0
        %834 = vmatpush1.msra.mxu0 %v641
        %835 = vmatprep.subr.mxu0 0.0
        %836 = vmatpush1.msra.mxu0 %v642
        %837 = vmatprep.subr.mxu0 0.0
        %838 = vmatpush1.msra.mxu0 %v643
        %839 = vmatprep.subr.mxu0 0.0
        %840 = vmatpush1.msra.mxu0 %v644
        %841 = vmatprep.subr.mxu0 0.0
        %842 = vmatpush1.msra.mxu0 0.0
        %843 = vmatprep.subr.mxu0 0.0
        %844 = vmatpush1.msra.mxu0 0.0
        %845 = vmatprep.subr.mxu0 0.0
        %846 = vmatpush1.msra.mxu0 0.0
        %847 = vmatprep.subr.mxu0 0.0
        %848 = vmatpush1.msra.mxu0 0.0
        %849 = vmatprep.subr.mxu0 0.0
        %850 = vmatpush1.msra.mxu0 0.0
        %851 = vmatprep.subr.mxu0 0.0
        %852 = vmatpush1.msra.mxu0 0.0
        %853 = vmatprep.subr.mxu0 0.0
        %854 = vmatpush1.msra.mxu0 0.0
        %855 = vmatprep.subr.mxu0 0.0
        %856 = vmatpush1.msra.mxu0 0.0
        %857 = vmatprep.subr.mxu0 0.0
        %858 = vmatpush1.msra.mxu0 0.0
        %859 = vmatprep.subr.mxu0 0.0
        %860 = vmatpush1.msra.mxu0 0.0
        %861 = vmatprep.subr.mxu0 0.0
        %862 = vmatpush1.msra.mxu0 0.0
        %863 = vmatprep.subr.mxu0 0.0
        %864 = vmatpush1.msra.mxu0 0.0
        %865 = vmatprep.subr.mxu0 0.0
        %866 = vmatpush1.msra.mxu0 0.0
        %867 = vmatprep.subr.mxu0 0.0
        %868 = vmatpush1.msra.mxu0 0.0
        %869 = vmatprep.subr.mxu0 0.0
        %870 = vmatpush1.msra.mxu0 0.0
        %871 = vmatprep.subr.mxu0 0.0
        %872 = vmatpush1.msra.mxu0 0.0
        %873 = vmatprep.mubr.f32.mxu0 0.0
        %874 = vmatmul.mubr.f32.gmra.mrb[0].mxu0 %v613
        %v875 = vpop.f32.mrb[0].mxu0
        %v876 = vadd.f32 %v731, %v875
        %v877 = vpop.f32.mrb[0].mxu0
        %878 = vmatprep.mubr.f32.mxu0 0.0
        %879 = vmatmul.mubr.f32.gmra.mrb[0].mxu0 %v614
        %v880 = vpop.f32.mrb[0].mxu0
        %v881 = vadd.f32 %v736, %v880
        %v882 = vpop.f32.mrb[0].mxu0
        %883 = vmatprep.mubr.f32.mxu0 0.0
        %884 = vmatmul.mubr.f32.gmra.mrb[0].mxu0 %v615
        %v885 = vpop.f32.mrb[0].mxu0
        %v886 = vadd.f32 %v741, %v885
        %v887 = vpop.f32.mrb[0].mxu0
        %888 = vmatprep.mubr.f32.mxu0 0.0
        %889 = vmatmul.mubr.f32.gmra.mrb[0].mxu0 %v616
        %v890 = vpop.f32.mrb[0].mxu0
        %v891 = vadd.f32 %v746, %v890
        %v892 = vpop.f32.mrb[0].mxu0
        %893 = vmatprep.mubr.f32.mxu0 0.0
        %894 = vmatmul.mubr.f32.gmra.mrb[0].mxu0 %v617
        %v895 = vpop.f32.mrb[0].mxu0
        %v896 = vadd.f32 %v751, %v895
        %v897 = vpop.f32.mrb[0].mxu0
        %898 = vmatprep.mubr.f32.mxu0 0.0
        %899 = vmatmul.mubr.f32.gmra.mrb[0].mxu0 %v618
        %v900 = vpop.f32.mrb[0].mxu0
        %v901 = vadd.f32 %v756, %v900
        %v902 = vpop.f32.mrb[0].mxu0
        %903 = vmatprep.mubr.f32.mxu0 0.0
        %904 = vmatmul.mubr.f32.gmra.mrb[0].mxu0 %v619
        %v905 = vpop.f32.mrb[0].mxu0
        %v906 = vadd.f32 %v761, %v905
        %v907 = vpop.f32.mrb[0].mxu0
        %908 = vmatprep.mubr.f32.mxu0 0.0
        %909 = vmatmul.mubr.f32.gmra.mrb[0].mxu0 %v620
        %v910 = vpop.f32.mrb[0].mxu0
        %v911 = vadd.f32 %v766, %v910
        %v912 = vpop.f32.mrb[0].mxu0
        %913 = vmatprep.mubr.f32.mxu0 0.0
        %914 = vmatmul.mubr.f32.gmra.mrb[0].mxu0 %v621
        %v915 = vpop.f32.mrb[0].mxu0
        %v916 = vadd.f32 %v771, %v915
        %v917 = vpop.f32.mrb[0].mxu0
        %918 = vmatprep.mubr.f32.mxu0 0.0
        %919 = vmatmul.mubr.f32.gmra.mrb[0].mxu0 %v622
        %v920 = vpop.f32.mrb[0].mxu0
        %v921 = vadd.f32 %v776, %v920
        %v922 = vpop.f32.mrb[0].mxu0
        %923 = vmatprep.mubr.f32.mxu0 0.0
        %924 = vmatmul.mubr.f32.gmra.mrb[0].mxu0 %v623
        %v925 = vpop.f32.mrb[0].mxu0
        %v926 = vadd.f32 %v781, %v925
        %v927 = vpop.f32.mrb[0].mxu0
        %928 = vmatprep.mubr.f32.mxu0 0.0
        %929 = vmatmul.mubr.f32.gmra.mrb[0].mxu0 %v624
        %v930 = vpop.f32.mrb[0].mxu0
        %v931 = vadd.f32 %v786, %v930
        %v932 = vpop.f32.mrb[0].mxu0
        %933 = vmatprep.mubr.f32.mxu0 0.0
        %934 = vmatmul.mubr.f32.gmra.mrb[0].mxu0 %v625
        %v935 = vpop.f32.mrb[0].mxu0
        %v936 = vadd.f32 %v791, %v935
        %v937 = vpop.f32.mrb[0].mxu0
        %938 = vmatprep.mubr.f32.mxu0 0.0
        %939 = vmatmul.mubr.f32.gmra.mrb[0].mxu0 %v626
        %v940 = vpop.f32.mrb[0].mxu0
        %v941 = vadd.f32 %v796, %v940
        %v942 = vpop.f32.mrb[0].mxu0
        %943 = vmatprep.mubr.f32.mxu0 0.0
        %944 = vmatmul.mubr.f32.gmra.mrb[0].mxu0 %v627
        %v945 = vpop.f32.mrb[0].mxu0
        %v946 = vadd.f32 %v801, %v945
        %v947 = vpop.f32.mrb[0].mxu0
        %948 = vmatprep.mubr.f32.mxu0 0.0
        %949 = vmatmul.mubr.f32.gmra.mrb[0].mxu0 %v628
        %v950 = vpop.f32.mrb[0].mxu0
        %v951 = vadd.f32 %v806, %v950
        %v952 = vpop.f32.mrb[0].mxu0
        %953 = vdwg.mxu0
        %v954 = vld [vmem:[#allocation2 + $0x20] sm:$0xff]
        %v955 = vld [vmem:[#allocation2 + $0x28] sm:$0xff]
        %v956 = vld [vmem:[#allocation2 + $0x30] sm:$0xff]
        %v957 = vld [vmem:[#allocation2 + $0x38] sm:$0xff]
        %v958 = vld [vmem:[#allocation2 + $0x40] sm:$0xff]
        %v959 = vld [vmem:[#allocation2 + $0x48] sm:$0xff]
        %v960 = vld [vmem:[#allocation2 + $0x50] sm:$0xff]
        %v961 = vld [vmem:[#allocation2 + $0x58] sm:$0xff]
        %v962 = vld [vmem:[#allocation2 + $0x60] sm:$0xff]
        %v963 = vld [vmem:[#allocation2 + $0x68] sm:$0xff]
        %v964 = vld [vmem:[#allocation2 + $0x70] sm:$0xff]
        %v965 = vld [vmem:[#allocation2 + $0x78] sm:$0xff]
        %v966 = vld [vmem:[#allocation2 + $0x80] sm:$0xff]
        %v967 = vld [vmem:[#allocation2 + $0x88] sm:$0xff]
        %v968 = vld [vmem:[#allocation2 + $0x90] sm:$0xff]
        %v969 = vld [vmem:[#allocation2 + $0x98] sm:$0xff]
        %s970 = scalar_lea.vmem %s1, 256
        %v971 = vld [vmem:[%s970] sm:$0xff]
        %v972 = vld [vmem:[%s970 + $0x8] sm:$0xff]
        %v973 = vld [vmem:[%s970 + $0x10] sm:$0xff]
        %v974 = vld [vmem:[%s970 + $0x18] sm:$0xff]
        %v975 = vld [vmem:[%s970 + $0x20] sm:$0xff]
        %v976 = vld [vmem:[%s970 + $0x28] sm:$0xff]
        %v977 = vld [vmem:[%s970 + $0x30] sm:$0xff]
        %v978 = vld [vmem:[%s970 + $0x38] sm:$0xff]
        %v979 = vld [vmem:[%s970 + $0x40] sm:$0xff]
        %v980 = vld [vmem:[%s970 + $0x48] sm:$0xff]
        %v981 = vld [vmem:[%s970 + $0x50] sm:$0xff]
        %v982 = vld [vmem:[%s970 + $0x58] sm:$0xff]
        %v983 = vld [vmem:[%s970 + $0x60] sm:$0xff]
        %v984 = vld [vmem:[%s970 + $0x68] sm:$0xff]
        %v985 = vld [vmem:[%s970 + $0x70] sm:$0xff]
        %v986 = vld [vmem:[%s970 + $0x78] sm:$0xff]
        %987 = vmatprep.subr.mxu0 0.0
        %988 = vmatpush1.msra.mxu0 %v971
        %989 = vmatprep.subr.mxu0 0.0
        %990 = vmatpush1.msra.mxu0 %v972
        %991 = vmatprep.subr.mxu0 0.0
        %992 = vmatpush1.msra.mxu0 %v973
        %993 = vmatprep.subr.mxu0 0.0
        %994 = vmatpush1.msra.mxu0 %v974
        %995 = vmatprep.subr.mxu0 0.0
        %996 = vmatpush1.msra.mxu0 %v975
        %997 = vmatprep.subr.mxu0 0.0
        %998 = vmatpush1.msra.mxu0 %v976
        %999 = vmatprep.subr.mxu0 0.0
        %1000 = vmatpush1.msra.mxu0 %v977
        %1001 = vmatprep.subr.mxu0 0.0
        %1002 = vmatpush1.msra.mxu0 %v978
        %1003 = vmatprep.subr.mxu0 0.0
        %1004 = vmatpush1.msra.mxu0 %v979
        %1005 = vmatprep.subr.mxu0 0.0
        %1006 = vmatpush1.msra.mxu0 %v980
        %1007 = vmatprep.subr.mxu0 0.0
        %1008 = vmatpush1.msra.mxu0 %v981
        %1009 = vmatprep.subr.mxu0 0.0
        %1010 = vmatpush1.msra.mxu0 %v982
        %1011 = vmatprep.subr.mxu0 0.0
        %1012 = vmatpush1.msra.mxu0 %v983
        %1013 = vmatprep.subr.mxu0 0.0
        %1014 = vmatpush1.msra.mxu0 %v984
        %1015 = vmatprep.subr.mxu0 0.0
        %1016 = vmatpush1.msra.mxu0 %v985
        %1017 = vmatprep.subr.mxu0 0.0
        %1018 = vmatpush1.msra.mxu0 %v986
        %1019 = vmatprep.subr.mxu0 0.0
        %1020 = vmatpush1.msra.mxu0 0.0
        %1021 = vmatprep.subr.mxu0 0.0
        %1022 = vmatpush1.msra.mxu0 0.0
        %1023 = vmatprep.subr.mxu0 0.0
        %1024 = vmatpush1.msra.mxu0 0.0
        %1025 = vmatprep.subr.mxu0 0.0
        %1026 = vmatpush1.msra.mxu0 0.0
        %1027 = vmatprep.subr.mxu0 0.0
        %1028 = vmatpush1.msra.mxu0 0.0
        %1029 = vmatprep.subr.mxu0 0.0
        %1030 = vmatpush1.msra.mxu0 0.0
        %1031 = vmatprep.subr.mxu0 0.0
        %1032 = vmatpush1.msra.mxu0 0.0
        %1033 = vmatprep.subr.mxu0 0.0
        %1034 = vmatpush1.msra.mxu0 0.0
        %1035 = vmatprep.subr.mxu0 0.0
        %1036 = vmatpush1.msra.mxu0 0.0
        %1037 = vmatprep.subr.mxu0 0.0
        %1038 = vmatpush1.msra.mxu0 0.0
        %1039 = vmatprep.subr.mxu0 0.0
        %1040 = vmatpush1.msra.mxu0 0.0
        %1041 = vmatprep.subr.mxu0 0.0
        %1042 = vmatpush1.msra.mxu0 0.0
        %1043 = vmatprep.subr.mxu0 0.0
        %1044 = vmatpush1.msra.mxu0 0.0
        %1045 = vmatprep.subr.mxu0 0.0
        %1046 = vmatpush1.msra.mxu0 0.0
        %1047 = vmatprep.subr.mxu0 0.0
        %1048 = vmatpush1.msra.mxu0 0.0
        %1049 = vmatprep.subr.mxu0 0.0
        %1050 = vmatpush1.msra.mxu0 0.0
        %1051 = vmatprep.mubr.f32.mxu0 0.0
        %1052 = vmatmul.mubr.f32.gmra.mrb[0].mxu0 %v954
        %v1053 = vpop.f32.mrb[0].mxu0
        %v1054 = vadd.f32 0.0, %v1053
        %v1055 = vpop.f32.mrb[0].mxu0
        %1056 = vmatprep.mubr.f32.mxu0 0.0
        %1057 = vmatmul.mubr.f32.gmra.mrb[0].mxu0 %v955
        %v1058 = vpop.f32.mrb[0].mxu0
        %v1059 = vadd.f32 0.0, %v1058
        %v1060 = vpop.f32.mrb[0].mxu0
        %1061 = vmatprep.mubr.f32.mxu0 0.0
        %1062 = vmatmul.mubr.f32.gmra.mrb[0].mxu0 %v956
        %v1063 = vpop.f32.mrb[0].mxu0
        %v1064 = vadd.f32 0.0, %v1063
        %v1065 = vpop.f32.mrb[0].mxu0
        %1066 = vmatprep.mubr.f32.mxu0 0.0
        %1067 = vmatmul.mubr.f32.gmra.mrb[0].mxu0 %v957
        %v1068 = vpop.f32.mrb[0].mxu0
        %v1069 = vadd.f32 0.0, %v1068
        %v1070 = vpop.f32.mrb[0].mxu0
        %1071 = vmatprep.mubr.f32.mxu0 0.0
        %1072 = vmatmul.mubr.f32.gmra.mrb[0].mxu0 %v958
        %v1073 = vpop.f32.mrb[0].mxu0
        %v1074 = vadd.f32 0.0, %v1073
        %v1075 = vpop.f32.mrb[0].mxu0
        %1076 = vmatprep.mubr.f32.mxu0 0.0
        %1077 = vmatmul.mubr.f32.gmra.mrb[0].mxu0 %v959
        %v1078 = vpop.f32.mrb[0].mxu0
        %v1079 = vadd.f32 0.0, %v1078
        %v1080 = vpop.f32.mrb[0].mxu0
        %1081 = vmatprep.mubr.f32.mxu0 0.0
        %1082 = vmatmul.mubr.f32.gmra.mrb[0].mxu0 %v960
        %v1083 = vpop.f32.mrb[0].mxu0
        %v1084 = vadd.f32 0.0, %v1083
        %v1085 = vpop.f32.mrb[0].mxu0
        %1086 = vmatprep.mubr.f32.mxu0 0.0
        %1087 = vmatmul.mubr.f32.gmra.mrb[0].mxu0 %v961
        %v1088 = vpop.f32.mrb[0].mxu0
        %v1089 = vadd.f32 0.0, %v1088
        %v1090 = vpop.f32.mrb[0].mxu0
        %1091 = vmatprep.mubr.f32.mxu0 0.0
        %1092 = vmatmul.mubr.f32.gmra.mrb[0].mxu0 %v962
        %v1093 = vpop.f32.mrb[0].mxu0
        %v1094 = vadd.f32 0.0, %v1093
        %v1095 = vpop.f32.mrb[0].mxu0
        %1096 = vmatprep.mubr.f32.mxu0 0.0
        %1097 = vmatmul.mubr.f32.gmra.mrb[0].mxu0 %v963
        %v1098 = vpop.f32.mrb[0].mxu0
        %v1099 = vadd.f32 0.0, %v1098
        %v1100 = vpop.f32.mrb[0].mxu0
        %1101 = vmatprep.mubr.f32.mxu0 0.0
        %1102 = vmatmul.mubr.f32.gmra.mrb[0].mxu0 %v964
        %v1103 = vpop.f32.mrb[0].mxu0
        %v1104 = vadd.f32 0.0, %v1103
        %v1105 = vpop.f32.mrb[0].mxu0
        %1106 = vmatprep.mubr.f32.mxu0 0.0
        %1107 = vmatmul.mubr.f32.gmra.mrb[0].mxu0 %v965
        %v1108 = vpop.f32.mrb[0].mxu0
        %v1109 = vadd.f32 0.0, %v1108
        %v1110 = vpop.f32.mrb[0].mxu0
        %1111 = vmatprep.mubr.f32.mxu0 0.0
        %1112 = vmatmul.mubr.f32.gmra.mrb[0].mxu0 %v966
        %v1113 = vpop.f32.mrb[0].mxu0
        %v1114 = vadd.f32 0.0, %v1113
        %v1115 = vpop.f32.mrb[0].mxu0
        %1116 = vmatprep.mubr.f32.mxu0 0.0
        %1117 = vmatmul.mubr.f32.gmra.mrb[0].mxu0 %v967
        %v1118 = vpop.f32.mrb[0].mxu0
        %v1119 = vadd.f32 0.0, %v1118
        %v1120 = vpop.f32.mrb[0].mxu0
        %1121 = vmatprep.mubr.f32.mxu0 0.0
        %1122 = vmatmul.mubr.f32.gmra.mrb[0].mxu0 %v968
        %v1123 = vpop.f32.mrb[0].mxu0
        %v1124 = vadd.f32 0.0, %v1123
        %v1125 = vpop.f32.mrb[0].mxu0
        %1126 = vmatprep.mubr.f32.mxu0 0.0
        %1127 = vmatmul.mubr.f32.gmra.mrb[0].mxu0 %v969
        %v1128 = vpop.f32.mrb[0].mxu0
        %v1129 = vadd.f32 0.0, %v1128
        %v1130 = vpop.f32.mrb[0].mxu0
        %1131 = vdwg.mxu0
        %v1132 = vadd.f32 %v876, %v1054
        %v1133 = vadd.f32 %v881, %v1059
        %v1134 = vadd.f32 %v886, %v1064
        %v1135 = vadd.f32 %v891, %v1069
        %v1136 = vadd.f32 %v896, %v1074
        %v1137 = vadd.f32 %v901, %v1079
        %v1138 = vadd.f32 %v906, %v1084
        %v1139 = vadd.f32 %v911, %v1089
        %v1140 = vadd.f32 %v916, %v1094
        %v1141 = vadd.f32 %v921, %v1099
        %v1142 = vadd.f32 %v926, %v1104
        %v1143 = vadd.f32 %v931, %v1109
        %v1144 = vadd.f32 %v936, %v1114
        %v1145 = vadd.f32 %v941, %v1119
        %v1146 = vadd.f32 %v946, %v1124
        %v1147 = vadd.f32 %v951, %v1129
        %v1148 = vld [vmem:[#allocation2 + $0x30] sm:$0xff]
        %v1149 = vld [vmem:[#allocation2 + $0x38] sm:$0xff]
        %v1150 = vld [vmem:[#allocation2 + $0x40] sm:$0xff]
        %v1151 = vld [vmem:[#allocation2 + $0x48] sm:$0xff]
        %v1152 = vld [vmem:[#allocation2 + $0x50] sm:$0xff]
        %v1153 = vld [vmem:[#allocation2 + $0x58] sm:$0xff]
        %v1154 = vld [vmem:[#allocation2 + $0x60] sm:$0xff]
        %v1155 = vld [vmem:[#allocation2 + $0x68] sm:$0xff]
        %v1156 = vld [vmem:[#allocation2 + $0x70] sm:$0xff]
        %v1157 = vld [vmem:[#allocation2 + $0x78] sm:$0xff]
        %v1158 = vld [vmem:[#allocation2 + $0x80] sm:$0xff]
        %v1159 = vld [vmem:[#allocation2 + $0x88] sm:$0xff]
        %v1160 = vld [vmem:[#allocation2 + $0x90] sm:$0xff]
        %v1161 = vld [vmem:[#allocation2 + $0x98] sm:$0xff]
        %v1162 = vld [vmem:[#allocation2 + $0xa0] sm:$0xff]
        %v1163 = vld [vmem:[#allocation2 + $0xa8] sm:$0xff]
        %s1164 = scalar_lea.vmem %s1, 384
        %v1165 = vld [vmem:[%s1164] sm:$0xff]
        %v1166 = vld [vmem:[%s1164 + $0x8] sm:$0xff]
        %v1167 = vld [vmem:[%s1164 + $0x10] sm:$0xff]
        %v1168 = vld [vmem:[%s1164 + $0x18] sm:$0xff]
        %v1169 = vld [vmem:[%s1164 + $0x20] sm:$0xff]
        %v1170 = vld [vmem:[%s1164 + $0x28] sm:$0xff]
        %v1171 = vld [vmem:[%s1164 + $0x30] sm:$0xff]
        %v1172 = vld [vmem:[%s1164 + $0x38] sm:$0xff]
        %v1173 = vld [vmem:[%s1164 + $0x40] sm:$0xff]
        %v1174 = vld [vmem:[%s1164 + $0x48] sm:$0xff]
        %v1175 = vld [vmem:[%s1164 + $0x50] sm:$0xff]
        %v1176 = vld [vmem:[%s1164 + $0x58] sm:$0xff]
        %v1177 = vld [vmem:[%s1164 + $0x60] sm:$0xff]
        %v1178 = vld [vmem:[%s1164 + $0x68] sm:$0xff]
        %v1179 = vld [vmem:[%s1164 + $0x70] sm:$0xff]
        %v1180 = vld [vmem:[%s1164 + $0x78] sm:$0xff]
        %1181 = vmatprep.subr.mxu0 0.0
        %1182 = vmatpush1.msra.mxu0 %v1165
        %1183 = vmatprep.subr.mxu0 0.0
        %1184 = vmatpush1.msra.mxu0 %v1166
        %1185 = vmatprep.subr.mxu0 0.0
        %1186 = vmatpush1.msra.mxu0 %v1167
        %1187 = vmatprep.subr.mxu0 0.0
        %1188 = vmatpush1.msra.mxu0 %v1168
        %1189 = vmatprep.subr.mxu0 0.0
        %1190 = vmatpush1.msra.mxu0 %v1169
        %1191 = vmatprep.subr.mxu0 0.0
        %1192 = vmatpush1.msra.mxu0 %v1170
        %1193 = vmatprep.subr.mxu0 0.0
        %1194 = vmatpush1.msra.mxu0 %v1171
        %1195 = vmatprep.subr.mxu0 0.0
        %1196 = vmatpush1.msra.mxu0 %v1172
        %1197 = vmatprep.subr.mxu0 0.0
        %1198 = vmatpush1.msra.mxu0 %v1173
        %1199 = vmatprep.subr.mxu0 0.0
        %1200 = vmatpush1.msra.mxu0 %v1174
        %1201 = vmatprep.subr.mxu0 0.0
        %1202 = vmatpush1.msra.mxu0 %v1175
        %1203 = vmatprep.subr.mxu0 0.0
        %1204 = vmatpush1.msra.mxu0 %v1176
        %1205 = vmatprep.subr.mxu0 0.0
        %1206 = vmatpush1.msra.mxu0 %v1177
        %1207 = vmatprep.subr.mxu0 0.0
        %1208 = vmatpush1.msra.mxu0 %v1178
        %1209 = vmatprep.subr.mxu0 0.0
        %1210 = vmatpush1.msra.mxu0 %v1179
        %1211 = vmatprep.subr.mxu0 0.0
        %1212 = vmatpush1.msra.mxu0 %v1180
        %1213 = vmatprep.subr.mxu0 0.0
        %1214 = vmatpush1.msra.mxu0 0.0
        %1215 = vmatprep.subr.mxu0 0.0
        %1216 = vmatpush1.msra.mxu0 0.0
        %1217 = vmatprep.subr.mxu0 0.0
        %1218 = vmatpush1.msra.mxu0 0.0
        %1219 = vmatprep.subr.mxu0 0.0
        %1220 = vmatpush1.msra.mxu0 0.0
        %1221 = vmatprep.subr.mxu0 0.0
        %1222 = vmatpush1.msra.mxu0 0.0
        %1223 = vmatprep.subr.mxu0 0.0
        %1224 = vmatpush1.msra.mxu0 0.0
        %1225 = vmatprep.subr.mxu0 0.0
        %1226 = vmatpush1.msra.mxu0 0.0
        %1227 = vmatprep.subr.mxu0 0.0
        %1228 = vmatpush1.msra.mxu0 0.0
        %1229 = vmatprep.subr.mxu0 0.0
        %1230 = vmatpush1.msra.mxu0 0.0
        %1231 = vmatprep.subr.mxu0 0.0
        %1232 = vmatpush1.msra.mxu0 0.0
        %1233 = vmatprep.subr.mxu0 0.0
        %1234 = vmatpush1.msra.mxu0 0.0
        %1235 = vmatprep.subr.mxu0 0.0
        %1236 = vmatpush1.msra.mxu0 0.0
        %1237 = vmatprep.subr.mxu0 0.0
        %1238 = vmatpush1.msra.mxu0 0.0
        %1239 = vmatprep.subr.mxu0 0.0
        %1240 = vmatpush1.msra.mxu0 0.0
        %1241 = vmatprep.subr.mxu0 0.0
        %1242 = vmatpush1.msra.mxu0 0.0
        %1243 = vmatprep.subr.mxu0 0.0
        %1244 = vmatpush1.msra.mxu0 0.0
        %1245 = vmatprep.mubr.f32.mxu0 0.0
        %1246 = vmatmul.mubr.f32.gmra.mrb[0].mxu0 %v1148
        %v1247 = vpop.f32.mrb[0].mxu0
        %v1248 = vadd.f32 0.0, %v1247
        %v1249 = vpop.f32.mrb[0].mxu0
        %1250 = vmatprep.mubr.f32.mxu0 0.0
        %1251 = vmatmul.mubr.f32.gmra.mrb[0].mxu0 %v1149
        %v1252 = vpop.f32.mrb[0].mxu0
        %v1253 = vadd.f32 0.0, %v1252
        %v1254 = vpop.f32.mrb[0].mxu0
        %1255 = vmatprep.mubr.f32.mxu0 0.0
        %1256 = vmatmul.mubr.f32.gmra.mrb[0].mxu0 %v1150
        %v1257 = vpop.f32.mrb[0].mxu0
        %v1258 = vadd.f32 0.0, %v1257
        %v1259 = vpop.f32.mrb[0].mxu0
        %1260 = vmatprep.mubr.f32.mxu0 0.0
        %1261 = vmatmul.mubr.f32.gmra.mrb[0].mxu0 %v1151
        %v1262 = vpop.f32.mrb[0].mxu0
        %v1263 = vadd.f32 0.0, %v1262
        %v1264 = vpop.f32.mrb[0].mxu0
        %1265 = vmatprep.mubr.f32.mxu0 0.0
        %1266 = vmatmul.mubr.f32.gmra.mrb[0].mxu0 %v1152
        %v1267 = vpop.f32.mrb[0].mxu0
        %v1268 = vadd.f32 0.0, %v1267
        %v1269 = vpop.f32.mrb[0].mxu0
        %1270 = vmatprep.mubr.f32.mxu0 0.0
        %1271 = vmatmul.mubr.f32.gmra.mrb[0].mxu0 %v1153
        %v1272 = vpop.f32.mrb[0].mxu0
        %v1273 = vadd.f32 0.0, %v1272
        %v1274 = vpop.f32.mrb[0].mxu0
        %1275 = vmatprep.mubr.f32.mxu0 0.0
        %1276 = vmatmul.mubr.f32.gmra.mrb[0].mxu0 %v1154
        %v1277 = vpop.f32.mrb[0].mxu0
        %v1278 = vadd.f32 0.0, %v1277
        %v1279 = vpop.f32.mrb[0].mxu0
        %1280 = vmatprep.mubr.f32.mxu0 0.0
        %1281 = vmatmul.mubr.f32.gmra.mrb[0].mxu0 %v1155
        %v1282 = vpop.f32.mrb[0].mxu0
        %v1283 = vadd.f32 0.0, %v1282
        %v1284 = vpop.f32.mrb[0].mxu0
        %1285 = vmatprep.mubr.f32.mxu0 0.0
        %1286 = vmatmul.mubr.f32.gmra.mrb[0].mxu0 %v1156
        %v1287 = vpop.f32.mrb[0].mxu0
        %v1288 = vadd.f32 0.0, %v1287
        %v1289 = vpop.f32.mrb[0].mxu0
        %1290 = vmatprep.mubr.f32.mxu0 0.0
        %1291 = vmatmul.mubr.f32.gmra.mrb[0].mxu0 %v1157
        %v1292 = vpop.f32.mrb[0].mxu0
        %v1293 = vadd.f32 0.0, %v1292
        %v1294 = vpop.f32.mrb[0].mxu0
        %1295 = vmatprep.mubr.f32.mxu0 0.0
        %1296 = vmatmul.mubr.f32.gmra.mrb[0].mxu0 %v1158
        %v1297 = vpop.f32.mrb[0].mxu0
        %v1298 = vadd.f32 0.0, %v1297
        %v1299 = vpop.f32.mrb[0].mxu0
        %1300 = vmatprep.mubr.f32.mxu0 0.0
        %1301 = vmatmul.mubr.f32.gmra.mrb[0].mxu0 %v1159
        %v1302 = vpop.f32.mrb[0].mxu0
        %v1303 = vadd.f32 0.0, %v1302
        %v1304 = vpop.f32.mrb[0].mxu0
        %1305 = vmatprep.mubr.f32.mxu0 0.0
        %1306 = vmatmul.mubr.f32.gmra.mrb[0].mxu0 %v1160
        %v1307 = vpop.f32.mrb[0].mxu0
        %v1308 = vadd.f32 0.0, %v1307
        %v1309 = vpop.f32.mrb[0].mxu0
        %1310 = vmatprep.mubr.f32.mxu0 0.0
        %1311 = vmatmul.mubr.f32.gmra.mrb[0].mxu0 %v1161
        %v1312 = vpop.f32.mrb[0].mxu0
        %v1313 = vadd.f32 0.0, %v1312
        %v1314 = vpop.f32.mrb[0].mxu0
        %1315 = vmatprep.mubr.f32.mxu0 0.0
        %1316 = vmatmul.mubr.f32.gmra.mrb[0].mxu0 %v1162
        %v1317 = vpop.f32.mrb[0].mxu0
        %v1318 = vadd.f32 0.0, %v1317
        %v1319 = vpop.f32.mrb[0].mxu0
        %1320 = vmatprep.mubr.f32.mxu0 0.0
        %1321 = vmatmul.mubr.f32.gmra.mrb[0].mxu0 %v1163
        %v1322 = vpop.f32.mrb[0].mxu0
        %v1323 = vadd.f32 0.0, %v1322
        %v1324 = vpop.f32.mrb[0].mxu0
        %1325 = vdwg.mxu0
        %v1326 = vadd.f32 %v1132, %v1248
        %v1327 = vadd.f32 %v1133, %v1253
        %v1328 = vadd.f32 %v1134, %v1258
        %v1329 = vadd.f32 %v1135, %v1263
        %v1330 = vadd.f32 %v1136, %v1268
        %v1331 = vadd.f32 %v1137, %v1273
        %v1332 = vadd.f32 %v1138, %v1278
        %v1333 = vadd.f32 %v1139, %v1283
        %v1334 = vadd.f32 %v1140, %v1288
        %v1335 = vadd.f32 %v1141, %v1293
        %v1336 = vadd.f32 %v1142, %v1298
        %v1337 = vadd.f32 %v1143, %v1303
        %v1338 = vadd.f32 %v1144, %v1308
        %v1339 = vadd.f32 %v1145, %v1313
        %v1340 = vadd.f32 %v1146, %v1318
        %v1341 = vadd.f32 %v1147, %v1323
        %v1342 = vld [vmem:[%s2] sm:$0x1]
        %v1344 = vlaneseq
        %v1345 = vshrl.u32 %v1344, 7
        %v1346 = vsub.s32 0, %v1345
        %v1347 = vrot.slane %v1342, %v1346
        %v1349 = vadd.f32 %v1326, %v1347
        %v1350 = vadd.f32 %v1327, %v1347
        %v1351 = vadd.f32 %v1328, %v1347
        %v1352 = vadd.f32 %v1329, %v1347
        %v1353 = vadd.f32 %v1330, %v1347
        %v1354 = vadd.f32 %v1331, %v1347
        %v1355 = vadd.f32 %v1332, %v1347
        %v1356 = vadd.f32 %v1333, %v1347
        %v1357 = vadd.f32 %v1334, %v1347
        %v1358 = vadd.f32 %v1335, %v1347
        %v1359 = vadd.f32 %v1336, %v1347
        %v1360 = vadd.f32 %v1337, %v1347
        %v1361 = vadd.f32 %v1338, %v1347
        %v1362 = vadd.f32 %v1339, %v1347
        %v1363 = vadd.f32 %v1340, %v1347
        %v1364 = vadd.f32 %v1341, %v1347
        %v1365 = vmax.f32 %v1349, 0.0
        %v1366 = vmax.f32 %v1350, 0.0
        %v1367 = vmax.f32 %v1351, 0.0
        %v1368 = vmax.f32 %v1352, 0.0
        %v1369 = vmax.f32 %v1353, 0.0
        %v1370 = vmax.f32 %v1354, 0.0
        %v1371 = vmax.f32 %v1355, 0.0
        %v1372 = vmax.f32 %v1356, 0.0
        %v1373 = vmax.f32 %v1357, 0.0
        %v1374 = vmax.f32 %v1358, 0.0
        %v1375 = vmax.f32 %v1359, 0.0
        %v1376 = vmax.f32 %v1360, 0.0
        %v1377 = vmax.f32 %v1361, 0.0
        %v1378 = vmax.f32 %v1362, 0.0
        %v1379 = vmax.f32 %v1363, 0.0
        %v1380 = vmax.f32 %v1364, 0.0
        %v1381 = vlaneseq
        %v1382 = vshrl.u32 %v1381, 7
        %v1383 = vadd.s32 %v1382, 8
        %vm1384 = vcmp.lt.s32.totalorder %v1382, 8
        %vm1385 = vcmp.lt.s32.totalorder %v1383, 8
        %v1386 = vsel %vm1384, %v1365, 0.0
        %v1387 = vsel %vm1385, %v1366, 0.0
        %v1388 = vsel %vm1384, %v1367, 0.0
        %v1389 = vsel %vm1385, %v1368, 0.0
        %v1390 = vsel %vm1384, %v1369, 0.0
        %v1391 = vsel %vm1385, %v1370, 0.0
        %v1392 = vsel %vm1384, %v1371, 0.0
        %v1393 = vsel %vm1385, %v1372, 0.0
        %v1394 = vsel %vm1384, %v1373, 0.0
        %v1395 = vsel %vm1385, %v1374, 0.0
        %v1396 = vsel %vm1384, %v1375, 0.0
        %v1397 = vsel %vm1385, %v1376, 0.0
        %v1398 = vsel %vm1384, %v1377, 0.0
        %v1399 = vsel %vm1385, %v1378, 0.0
        %v1400 = vsel %vm1384, %v1379, 0.0
        %v1401 = vsel %vm1385, %v1380, 0.0
        %v1402 = vmax.f32 %v1386, 0.0
        %v1403 = vmax.f32 %v1387, 0.0
        %v1404 = vmax.f32 %v1388, %v1390
        %v1405 = vmax.f32 %v1389, %v1391
        %v1406 = vmax.f32 %v1392, %v1394
        %v1407 = vmax.f32 %v1393, %v1395
        %v1408 = vmax.f32 %v1396, %v1398
        %v1409 = vmax.f32 %v1397, %v1399
        %v1410 = vmax.f32 %v1402, %v1388
        %v1411 = vmax.f32 %v1403, %v1389
        %v1412 = vmax.f32 %v1404, %v1392
        %v1413 = vmax.f32 %v1405, %v1393
        %v1414 = vmax.f32 %v1406, %v1396
        %v1415 = vmax.f32 %v1407, %v1397
        %v1416 = vmax.f32 %v1408, %v1400
        %v1417 = vmax.f32 %v1409, %v1401
        %vm1418 = vcmask 516096
        %1419 = vst.msk [vmem:[#allocation3 + $0x7] sm:$0x1] %vm1418, 0.0
        %1420 = vst.msk [vmem:[#allocation3 + $0x1f] sm:$0x1] %vm1418, 0.0
        %1421 = vst.msk [vmem:[#allocation3 + $0x37] sm:$0x1] %vm1418, 0.0
        %1422 = vst.msk [vmem:[#allocation3 + $0x4f] sm:$0x1] %vm1418, 0.0
        %vm1423 = vcmask 523264
        %1424 = vst.msk [vmem:[#allocation3 + $0x8] sm:$0xff] %vm1423, %v1410
        %1425 = vst.msk [vmem:[#allocation3 + $0x10] sm:$0xff] %vm1423, %v1411
        %1426 = vst.msk [vmem:[#allocation3 + $0x20] sm:$0xff] %vm1423, %v1412
        %1427 = vst.msk [vmem:[#allocation3 + $0x28] sm:$0xff] %vm1423, %v1413
        %1428 = vst.msk [vmem:[#allocation3 + $0x38] sm:$0xff] %vm1423, %v1414
        %1429 = vst.msk [vmem:[#allocation3 + $0x40] sm:$0xff] %vm1423, %v1415
        %1430 = vst.msk [vmem:[#allocation3 + $0x50] sm:$0xff] %vm1423, %v1416
        %1431 = vst.msk [vmem:[#allocation3 + $0x58] sm:$0xff] %vm1423, %v1417
        %s1432 = scalar_lea.vmem [#allocation3], 7
        %v1433 = vld [vmem:[%s1432] ss:$2 sm:$0xf]
        %s1434 = scalar_lea.vmem [#allocation3], 31
        %v1435 = vld [vmem:[%s1434] ss:$2 sm:$0xf]
        %s1436 = scalar_lea.vmem [#allocation3], 55
        %v1437 = vld [vmem:[%s1436] ss:$2 sm:$0xf]
        %s1438 = scalar_lea.vmem [#allocation3], 79
        %v1439 = vld [vmem:[%s1438] ss:$2 sm:$0xf]
        %s1440 = scalar_lea.vmem [#allocation3], 8
        %v1441 = vld [vmem:[%s1440] ss:$2 sm:$0xf]
        %s1442 = scalar_lea.vmem [#allocation3], 32
        %v1443 = vld [vmem:[%s1442] ss:$2 sm:$0xf]
        %s1444 = scalar_lea.vmem [#allocation3], 56
        %v1445 = vld [vmem:[%s1444] ss:$2 sm:$0xf]
        %s1446 = scalar_lea.vmem [#allocation3], 80
        %v1447 = vld [vmem:[%s1446] ss:$2 sm:$0xf]
        %v1448 = vmax.f32 %v1433, %v1441
        %v1449 = vmax.f32 %v1435, %v1443
        %v1450 = vmax.f32 %v1437, %v1445
        %v1451 = vmax.f32 %v1439, %v1447
        %s1452 = scalar_lea.vmem [#allocation3], 9
        %v1453 = vld [vmem:[%s1452] ss:$2 sm:$0xf]
        %s1454 = scalar_lea.vmem [#allocation3], 33
        %v1455 = vld [vmem:[%s1454] ss:$2 sm:$0xf]
        %s1456 = scalar_lea.vmem [#allocation3], 57
        %v1457 = vld [vmem:[%s1456] ss:$2 sm:$0xf]
        %s1458 = scalar_lea.vmem [#allocation3], 81
        %v1459 = vld [vmem:[%s1458] ss:$2 sm:$0xf]
        %v1460 = vmax.f32 %v1448, %v1453
        %v1461 = vmax.f32 %v1449, %v1455
        %v1462 = vmax.f32 %v1450, %v1457
        %v1463 = vmax.f32 %v1451, %v1459
        %vm1464 = vcmask 519168
        %1465 = vst.msk [vmem:[%s163] sm:$0xf] %vm1464, %v1460
        %1466 = vst.msk [vmem:[%s163 + $0x4] sm:$0xf] %vm1464, %v1461
        %1467 = vst.msk [vmem:[%s163 + $0x8] sm:$0xf] %vm1464, %v1462
        %1468 = vst.msk [vmem:[%s163 + $0xc] sm:$0xf] %vm1464, %v1463
        %s1469 = sand.u32 %s93, 1
        %s1470 = scalar_lea.sflag [#allocation5], %s1469
        %s1471 = sand.u32 %s93, 1
        %s1472 = smul.addr %s1471, 16
        %s1473 = scalar_lea.vmem [#allocation4], %s1472
        // Predicated region
        $region33: #{net_exit1_part1l_forward.1} parent=31 // pred_check
          %p1474 = pneg %p103
        $region34: #{net_exit1_part1l_forward.1} parent=31 // pred_check_branch
          %1476 = sbr.rel (%p1474) target = $region36
        $region35: #{net_exit1_part1l_forward.1} parent=31 // pred_region
          %s1478 = ssub.s32 256, 256
          %1479 = vsyncadd %s1470, %s1478
          %s1480 = smul.addr %s17, 4
          %s1481 = smul.addr %s1480, 64
          %s1482 = scalar_lea.hbm %s3, %s1481
          %s1483 = sshll.u32 %s1473, 4
          %s1484 = int_to_ptr.vmem [resolvable:$true] %s1483
          %1489 = dma.vmem_to_hbm [thread:$0]  %s1484, 256, %s1482, %s1470, 64, 64, 4
        $region36: #{net_exit1_part1l_forward.1} parent=31 // pred_fallthru
          _
      $region32: #{net_exit1_part1l_forward.1} parent=5 // pred_fallthru
        _
      %p1490 = scmp.le.s32.totalorder 2, %s12
      // Predicated region
      $region37: #{net_exit1_part1l_forward.1} parent=5 // pred_check
        %p1491 = pneg %p1490
      $region38: #{net_exit1_part1l_forward.1} parent=5 // pred_check_branch
        %1493 = sbr.rel (%p1491) target = $region40
      $region39: #{net_exit1_part1l_forward.1} parent=5 // pred_region
        %s1494 = ssub.s32 %s12, 2
        // Predicated region
        $region41: #{net_exit1_part1l_forward.1} parent=39 // pred_check
          %p1495 = pneg %p109
        $region42: #{net_exit1_part1l_forward.1} parent=39 // pred_check_branch
          %1497 = sbr.rel (%p1495) target = $region44
        $region43: #{net_exit1_part1l_forward.1} parent=39 // pred_region
          %s1498 = sand.u32 %s94, 1
          %s1499 = scalar_lea.sflag [#allocation5], %s1498
          %s1500 = sand.u32 %s94, 1
          %s1501 = smul.addr %s1500, 16
          %s1502 = scalar_lea.vmem [#allocation4], %s1501
          %1503 = dma.done %s1499, 256
        $region44: #{net_exit1_part1l_forward.1} parent=39 // pred_fallthru
          _
      $region40: #{net_exit1_part1l_forward.1} parent=5 // pred_fallthru
        _
    $region6: #{net_exit1_part1l_forward.1} parent=1 // loop_footer
      %s16 = sadd.s32 1, %s12
    $region7: #{net_exit1_part1l_forward.1} parent=1 // loop_footer_branch
      %11 = sbr.rel target = $region3
    $region8: #{net_exit1_part1l_forward.1} parent=1 // loop_exit
      _
    %1504 = vsyncpa [#allocation5], 1
    %s1505 = scalar_lea.sflag [#allocation5], 1
    %1506 = vsyncpa %s1505, 1

</llo_original>
